<compile_context>
chip_gen: v6e
topology: v6e:2x2x1
jax: 0.10.0
libtpu: 0.0.40
codegen_flags: <defaults>
</compile_context>

<pallas_src>
import jax
import jax.numpy as jnp
from jax.experimental import pallas as pl
from jax.experimental.pallas import tpu as pltpu

IN_SIZE = 2883
H1 = 100
H2 = 50
OUT_SIZE = 4

# Lane / (8,128)-tile friendly padded sizes.
IN_PAD = 2944    # 23 * 128
H1_PAD = 128
H2_PAD = 128
OUT_PAD = 128    # lane-dense output slab; real logits live in [:, :OUT_SIZE]


def _round_up(x, m):
    return (x + m - 1) // m * m


def _mlp_kernel(x_ref, w1_ref, b1_ref, w2_ref, b2_ref, w3_ref, o_ref):
    # Layer 1: bf16 inputs on the MXU, f32 accumulation; bias + ReLU in f32.
    h1 = jnp.dot(x_ref[...], w1_ref[...], preferred_element_type=jnp.float32)
    h1 = jnp.maximum(h1 + b1_ref[...], 0.0)
    # Layer 2.
    h2 = jnp.dot(h1.astype(jnp.bfloat16), w2_ref[...],
                 preferred_element_type=jnp.float32)
    h2 = jnp.maximum(h2 + b2_ref[...], 0.0)
    # Output layer (no bias); lane-dense (TILE_N, 128) f32 store.
    o_ref[...] = jnp.dot(h2.astype(jnp.bfloat16), w3_ref[...],
                         preferred_element_type=jnp.float32)


def prepare_params(w1, b1, w2, b2, w3):
    """One-time: zero-pad weights to MXU-friendly shapes, cast matmul operands
    to bf16, keep biases f32. Weight layout is (in, out) so kernel does x @ W."""
    w1p = jnp.zeros((IN_PAD, H1_PAD), jnp.float32).at[:IN_SIZE, :H1].set(w1)
    b1p = jnp.zeros((1, H1_PAD), jnp.float32).at[:, :H1].set(b1.reshape(1, H1))
    w2p = jnp.zeros((H1_PAD, H2_PAD), jnp.float32).at[:H1, :H2].set(w2)
    b2p = jnp.zeros((1, H2_PAD), jnp.float32).at[:, :H2].set(b2.reshape(1, H2))
    w3p = jnp.zeros((H2_PAD, OUT_PAD), jnp.float32).at[:H2, :OUT_SIZE].set(w3)
    return (w1p.astype(jnp.bfloat16), b1p,
            w2p.astype(jnp.bfloat16), b2p,
            w3p.astype(jnp.bfloat16))


def neuralnet_forward(x, params, tile_n=256):
    """Forward pass of NeuralNet. x: (N, 2883) f32. Returns (N, 4) f32."""
    w1p, b1p, w2p, b2p, w3p = params
    n = x.shape[0]
    # Small batches: shrink the tile instead of padding to 256 rows.
    tile_n = min(tile_n, max(_round_up(n, 8), 8))
    n_pad = _round_up(n, tile_n)
    grid = (n_pad // tile_n,)

    # Pad x to (n_pad, IN_PAD) and cast to bf16 (halves the x HBM DMA volume).
    xp = jnp.zeros((n_pad, IN_PAD), jnp.bfloat16)
    xp = xp.at[:n, :IN_SIZE].set(x.astype(jnp.bfloat16))

    flops = 2 * n_pad * (IN_PAD * H1_PAD + H1_PAD * H2_PAD + H2_PAD * OUT_PAD)
    bytes_accessed = (xp.size * 2
                      + (w1p.size + w2p.size + w3p.size) * 2
                      + (b1p.size + b2p.size) * 4
                      + n_pad * OUT_PAD * 4)

    resident = lambda shape: pl.BlockSpec(shape, lambda i: (0, 0))

    out = pl.pallas_call(
        _mlp_kernel,
        out_shape=jax.ShapeDtypeStruct((n_pad, OUT_PAD), jnp.float32),
        grid=grid,
        in_specs=[
            pl.BlockSpec((tile_n, IN_PAD), lambda i: (i, 0)),   # x: tiled over batch
            resident((IN_PAD, H1_PAD)),                          # W1 (resident)
            resident((1, H1_PAD)),                               # b1
            resident((H1_PAD, H2_PAD)),                          # W2
            resident((1, H2_PAD)),                               # b2
            resident((H2_PAD, OUT_PAD)),                         # W3
        ],
        out_specs=pl.BlockSpec((tile_n, OUT_PAD), lambda i: (i, 0)),
        compiler_params=pltpu.CompilerParams(
            dimension_semantics=("parallel",),
        ),
        cost_estimate=pl.CostEstimate(
            flops=flops, transcendentals=0, bytes_accessed=bytes_accessed),
    )(xp, w1p, b1p, w2p, b2p, w3p)

    return out[:n, :OUT_SIZE]


def init_params(key):
    """Deterministic PyTorch-Linear-style uniform init (kaiming-uniform-ish)."""
    k1, k2, k3, k4, k5 = jax.random.split(key, 5)

    def unif(k, shape, fan_in):
        bound = 1.0 / jnp.sqrt(fan_in)
        return jax.random.uniform(k, shape, jnp.float32, -bound, bound)

    w1 = unif(k1, (IN_SIZE, H1), IN_SIZE)
    b1 = unif(k2, (1, H1), IN_SIZE)
    w2 = unif(k3, (H1, H2), H1)
    b2 = unif(k4, (1, H2), H1)
    w3 = unif(k5, (H2, OUT_SIZE), H2)
    return w1, b1, w2, b2, w3


if __name__ == "__main__":
    # TODO(synk): training path (SGD step / CrossEntropyLoss) is not a kernel;
    # only the forward pass is implemented here.
    key = jax.random.PRNGKey(0)
    kx, kp = jax.random.split(key)
    N = 8  # small batch
    x = jax.random.normal(kx, (N, IN_SIZE), jnp.float32)
    w1, b1, w2, b2, w3 = init_params(kp)
    params = prepare_params(w1, b1, w2, b2, w3)

    out = neuralnet_forward(x, params)
    out = jax.block_until_ready(out)
    assert out.shape == (N, OUT_SIZE)

    # Reference 1: same numerics as the kernel (bf16 matmuls, f32 accumulation).
    def bf16_ref(x, w1, b1, w2, b2, w3):
        h = jnp.dot(x.astype(jnp.bfloat16), w1.astype(jnp.bfloat16),
                    preferred_element_type=jnp.float32)
        h = jnp.maximum(h + b1, 0.0)
        h = jnp.dot(h.astype(jnp.bfloat16), w2.astype(jnp.bfloat16),
                    preferred_element_type=jnp.float32)
        h = jnp.maximum(h + b2, 0.0)
        return jnp.dot(h.astype(jnp.bfloat16), w3.astype(jnp.bfloat16),
                       preferred_element_type=jnp.float32)

    ref_b = bf16_ref(x, w1, b1, w2, b2, w3)
    assert jnp.allclose(out, ref_b, atol=2e-3, rtol=2e-3), "bf16 ref mismatch"

    # Reference 2: torch-semantics pure-f32 check (loose tol: bf16 matmul inputs).
    ref_f = jnp.maximum(x @ w1 + b1, 0.0)
    ref_f = jnp.maximum(ref_f @ w2 + b2, 0.0)
    ref_f = ref_f @ w3
    assert jnp.allclose(out, ref_f, atol=5e-2, rtol=5e-2), "f32 ref mismatch"

    print("KERNEL_OK")
</pallas_src>

<mosaic_0001>
module attributes {stable_mosaic.version = 11 : i64} {
  func.func @_mlp_kernel(%arg0: i32, %arg1: memref<8x2944xbf16, #tpu.memory_space<vmem>>, %arg2: memref<2944x128xbf16, #tpu.memory_space<vmem>>, %arg3: memref<1x128xf32, #tpu.memory_space<vmem>>, %arg4: memref<128x128xbf16, #tpu.memory_space<vmem>>, %arg5: memref<1x128xf32, #tpu.memory_space<vmem>>, %arg6: memref<128x128xbf16, #tpu.memory_space<vmem>>, %arg7: memref<8x128xf32, #tpu.memory_space<vmem>>) attributes {dimension_semantics = [#tpu.dimension_semantics<parallel>], iteration_bounds = array<i64: 1>, scalar_prefetch = 0 : i64, scratch_operands = 0 : i64, tpu.core_type = #tpu.core_type<tc>, window_params = [{transform_indices = @transform_0, window_bounds = array<i64: 8, 2944>}, {pipeline_mode = #tpu.pipeline_mode<synchronous>, transform_indices = @transform_1, window_bounds = array<i64: 2944, 128>}, {pipeline_mode = #tpu.pipeline_mode<synchronous>, transform_indices = @transform_2, window_bounds = array<i64: 1, 128>}, {pipeline_mode = #tpu.pipeline_mode<synchronous>, transform_indices = @transform_3, window_bounds = array<i64: 128, 128>}, {pipeline_mode = #tpu.pipeline_mode<synchronous>, transform_indices = @transform_4, window_bounds = array<i64: 1, 128>}, {pipeline_mode = #tpu.pipeline_mode<synchronous>, transform_indices = @transform_5, window_bounds = array<i64: 128, 128>}, {transform_indices = @transform_6, window_bounds = array<i64: 8, 128>}]} {
    %c0 = arith.constant 0 : index
    %c0_0 = arith.constant 0 : index
    %0 = vector.load %arg1[%c0, %c0_0] : memref<8x2944xbf16, #tpu.memory_space<vmem>>, vector<8x2944xbf16>
    %c0_1 = arith.constant 0 : index
    %c0_2 = arith.constant 0 : index
    %1 = vector.load %arg2[%c0_1, %c0_2] : memref<2944x128xbf16, #tpu.memory_space<vmem>>, vector<2944x128xbf16>
    %cst = arith.constant dense<0.000000e+00> : vector<8x128xf32>
    %2 = tpu.matmul %0, %1, %cst {dimension_numbers = #tpu.dot_dimension_numbers<[1], [0], [0], [1], [0, 0, 1, 1], [], []>} : vector<8x2944xbf16>, vector<2944x128xbf16>, vector<8x128xf32> -> vector<8x128xf32>
    %c0_3 = arith.constant 0 : index
    %c0_4 = arith.constant 0 : index
    %3 = vector.load %arg3[%c0_3, %c0_4] : memref<1x128xf32, #tpu.memory_space<vmem>>, vector<1x128xf32>
    %4 = vector.broadcast %3 : vector<1x128xf32> to vector<8x128xf32>
    %5 = arith.addf %2, %4 : vector<8x128xf32>
    %cst_5 = arith.constant 0.000000e+00 : f32
    %6 = vector.broadcast %cst_5 : f32 to vector<8x128xf32>
    %7 = arith.maximumf %5, %6 : vector<8x128xf32>
    %8 = arith.truncf %7 : vector<8x128xf32> to vector<8x128xbf16>
    %c0_6 = arith.constant 0 : index
    %c0_7 = arith.constant 0 : index
    %9 = vector.load %arg4[%c0_6, %c0_7] : memref<128x128xbf16, #tpu.memory_space<vmem>>, vector<128x128xbf16>
    %cst_8 = arith.constant dense<0.000000e+00> : vector<8x128xf32>
    %10 = tpu.matmul %8, %9, %cst_8 {dimension_numbers = #tpu.dot_dimension_numbers<[1], [0], [0], [1], [0, 0, 1, 1], [], []>} : vector<8x128xbf16>, vector<128x128xbf16>, vector<8x128xf32> -> vector<8x128xf32>
    %c0_9 = arith.constant 0 : index
    %c0_10 = arith.constant 0 : index
    %11 = vector.load %arg5[%c0_9, %c0_10] : memref<1x128xf32, #tpu.memory_space<vmem>>, vector<1x128xf32>
    %12 = vector.broadcast %11 : vector<1x128xf32> to vector<8x128xf32>
    %13 = arith.addf %10, %12 : vector<8x128xf32>
    %cst_11 = arith.constant 0.000000e+00 : f32
    %14 = vector.broadcast %cst_11 : f32 to vector<8x128xf32>
    %15 = arith.maximumf %13, %14 : vector<8x128xf32>
    %16 = arith.truncf %15 : vector<8x128xf32> to vector<8x128xbf16>
    %c0_12 = arith.constant 0 : index
    %c0_13 = arith.constant 0 : index
    %17 = vector.load %arg6[%c0_12, %c0_13] : memref<128x128xbf16, #tpu.memory_space<vmem>>, vector<128x128xbf16>
    %cst_14 = arith.constant dense<0.000000e+00> : vector<8x128xf32>
    %18 = tpu.matmul %16, %17, %cst_14 {dimension_numbers = #tpu.dot_dimension_numbers<[1], [0], [0], [1], [0, 0, 1, 1], [], []>} : vector<8x128xbf16>, vector<128x128xbf16>, vector<8x128xf32> -> vector<8x128xf32>
    %c0_15 = arith.constant 0 : index
    %c0_16 = arith.constant 0 : index
    %19 = vector.load %arg7[%c0_15, %c0_16] : memref<8x128xf32, #tpu.memory_space<vmem>>, vector<8x128xf32>
    tpu.vector_store %arg7[%c0_15, %c0_16], %18 {strides = array<i32>} : memref<8x128xf32, #tpu.memory_space<vmem>>, vector<8x128xf32>,
    return
  }
  func.func @transform_0(%arg0: i32) -> (i32, i32) {
    %c0_i32 = arith.constant 0 : i32
    %c0_i32_0 = arith.constant 0 : i32
    return %arg0, %c0_i32 : i32, i32
  }
  func.func @transform_1(%arg0: i32) -> (i32, i32) {
    %c0_i32 = arith.constant 0 : i32
    %c0_i32_0 = arith.constant 0 : i32
    %c0_i32_1 = arith.constant 0 : i32
    return %c0_i32, %c0_i32_0 : i32, i32
  }
  func.func @transform_2(%arg0: i32) -> (i32, i32) {
    %c0_i32 = arith.constant 0 : i32
    %c0_i32_0 = arith.constant 0 : i32
    %c0_i32_1 = arith.constant 0 : i32
    return %c0_i32, %c0_i32_0 : i32, i32
  }
  func.func @transform_3(%arg0: i32) -> (i32, i32) {
    %c0_i32 = arith.constant 0 : i32
    %c0_i32_0 = arith.constant 0 : i32
    %c0_i32_1 = arith.constant 0 : i32
    return %c0_i32, %c0_i32_0 : i32, i32
  }
  func.func @transform_4(%arg0: i32) -> (i32, i32) {
    %c0_i32 = arith.constant 0 : i32
    %c0_i32_0 = arith.constant 0 : i32
    %c0_i32_1 = arith.constant 0 : i32
    return %c0_i32, %c0_i32_0 : i32, i32
  }
  func.func @transform_5(%arg0: i32) -> (i32, i32) {
    %c0_i32 = arith.constant 0 : i32
    %c0_i32_0 = arith.constant 0 : i32
    %c0_i32_1 = arith.constant 0 : i32
    return %c0_i32, %c0_i32_0 : i32, i32
  }
  func.func @transform_6(%arg0: i32) -> (i32, i32) {
    %c0_i32 = arith.constant 0 : i32
    %c0_i32_0 = arith.constant 0 : i32
    return %arg0, %c0_i32 : i32, i32
  }
}

</mosaic_0001>

<llo_original>
// kernel: tpu_custom_call.1
$region0: #{tpu_custom_call.1}
  #allocation0 [shape = 'u32[]', space=smem, size = 0x4, offset = 0x4, fixed_abs, tag = 'smem constant byte address 0x4 - core index']
  #allocation1 [shape = 'u32[144,128]{1,0:T(1,128)}', space=vmem, size = 0x12000, scoped, tag = 'internal scratch']
  %s0 = inlined_call_operand.hbm [shape: bf16[8,2944], index: 0, kind: input, shape index: {}]
  %s1 = inlined_call_operand.hbm [shape: bf16[2944,128], index: 1, kind: input, shape index: {}]
  %s2 = inlined_call_operand.vmem [shape: f32[1,128], index: 2, kind: input, shape index: {}]
  %s3 = inlined_call_operand.hbm [shape: bf16[128,128], index: 3, kind: input, shape index: {}]
  %s4 = inlined_call_operand.vmem [shape: f32[1,128], index: 4, kind: input, shape index: {}]
  %s5 = inlined_call_operand.hbm [shape: bf16[128,128], index: 5, kind: input, shape index: {}]
  %s6 = inlined_call_operand.hbm [shape: f32[8,128], index: 6, kind: output, shape index: {}]
  %s7 = sld [smem:[#allocation0]]
  $region50: #{tpu_custom_call.1} parent=0
    _
  %s9 = ssub.s32 1, %s7
  %s10 = scalar_select 0, %s9, %s7
  $region1: #{tpu_custom_call.1} parent=0
    #allocation2 [shape = 'u8[47104]{0}', space=vmem, size = 0xb800, scoped, tag = 'input window, operand 0, single buffered']
    #allocation3 [shape = 's32[1]{0}', space=sflag, size = 0x4, scoped, tag = 'scoped memory for tpu_custom_call.1']
    #allocation4 [shape = 's32[1]{0}', space=sflag, size = 0x4, scoped, tag = 'scoped memory for tpu_custom_call.1']
    #allocation5 [shape = 'u8[753664]{0}', space=vmem, size = 0xb8000, scoped, tag = 'input window, operand 1, single buffered']
    #allocation6 [shape = 's32[1]{0}', space=sflag, size = 0x4, scoped, tag = 'scoped memory for tpu_custom_call.1']
    #allocation7 [shape = 'u8[32768]{0}', space=vmem, size = 0x8000, scoped, tag = 'input window, operand 3, single buffered']
    #allocation8 [shape = 'u8[32768]{0}', space=vmem, size = 0x8000, scoped, tag = 'input window, operand 5, single buffered']
    #allocation9 [shape = 's32[1]{0}', space=sflag, size = 0x4, scoped, tag = 'scoped memory for tpu_custom_call.1']
    #allocation10 [shape = 'u8[4096]{0}', space=vmem, size = 0x1000, scoped, tag = 'output window, operand 0, single buffered']
    %11 = vsyncpa [#allocation3], 0
    %12 = vsyncpa [#allocation6], 0
    %13 = vsyncpa [#allocation9], 0
    %14 = vsyncpa [#allocation4], 0
    // Predicated region
    $region2: #{tpu_custom_call.1} parent=1 // pred_check
      _
    $region3: #{tpu_custom_call.1} parent=1 // pred_check_branch
      %16 = sbr.rel (0) target = $region5
    $region4: #{tpu_custom_call.1} parent=1 // pred_region
      %s18 = ssub.s32 1472, 1472
      %19 = vsyncadd [#allocation3], %s18
      %s21 = sshll.u32 [#allocation2], 4
      %s22 = int_to_ptr.vmem [resolvable:$true] %s21
      %24 = dma.hbm_to_vmem [thread:$0]  %s0, 1472, %s22, [#allocation3]
    $region5: #{tpu_custom_call.1} parent=1 // pred_fallthru
      _
    // Predicated region
    $region6: #{tpu_custom_call.1} parent=1 // pred_check
      _
    $region7: #{tpu_custom_call.1} parent=1 // pred_check_branch
      %26 = sbr.rel (0) target = $region9
    $region8: #{tpu_custom_call.1} parent=1 // pred_region
      %s28 = ssub.s32 23552, 23552
      %29 = vsyncadd [#allocation6], %s28
      %s30 = sshll.u32 [#allocation5], 4
      %s31 = int_to_ptr.vmem [resolvable:$true] %s30
      %36 = dma.hbm_to_vmem [thread:$0]  %s1, 23552, %s31, [#allocation6], 64, 64, 4
    $region9: #{tpu_custom_call.1} parent=1 // pred_fallthru
      _
    // Predicated region
    $region10: #{tpu_custom_call.1} parent=1 // pred_check
      _
    $region11: #{tpu_custom_call.1} parent=1 // pred_check_branch
      %38 = sbr.rel (0) target = $region13
    $region12: #{tpu_custom_call.1} parent=1 // pred_region
      _
    $region13: #{tpu_custom_call.1} parent=1 // pred_fallthru
      _
    // Predicated region
    $region14: #{tpu_custom_call.1} parent=1 // pred_check
      _
    $region15: #{tpu_custom_call.1} parent=1 // pred_check_branch
      %40 = sbr.rel (0) target = $region17
    $region16: #{tpu_custom_call.1} parent=1 // pred_region
      %s42 = ssub.s32 1024, 1024
      %43 = vsyncadd [#allocation6], %s42
      %s44 = sshll.u32 [#allocation7], 4
      %s45 = int_to_ptr.vmem [resolvable:$true] %s44
      %50 = dma.hbm_to_vmem [thread:$0]  %s3, 1024, %s45, [#allocation6], 64, 64, 4
    $region17: #{tpu_custom_call.1} parent=1 // pred_fallthru
      _
    // Predicated region
    $region18: #{tpu_custom_call.1} parent=1 // pred_check
      _
    $region19: #{tpu_custom_call.1} parent=1 // pred_check_branch
      %52 = sbr.rel (0) target = $region21
    $region20: #{tpu_custom_call.1} parent=1 // pred_region
      _
    $region21: #{tpu_custom_call.1} parent=1 // pred_fallthru
      _
    // Predicated region
    $region22: #{tpu_custom_call.1} parent=1 // pred_check
      _
    $region23: #{tpu_custom_call.1} parent=1 // pred_check_branch
      %54 = sbr.rel (0) target = $region25
    $region24: #{tpu_custom_call.1} parent=1 // pred_region
      %s56 = ssub.s32 1024, 1024
      %57 = vsyncadd [#allocation9], %s56
      %s58 = sshll.u32 [#allocation8], 4
      %s59 = int_to_ptr.vmem [resolvable:$true] %s58
      %64 = dma.hbm_to_vmem [thread:$0]  %s5, 1024, %s59, [#allocation9], 64, 64, 4
    $region25: #{tpu_custom_call.1} parent=1 // pred_fallthru
      _
    // Predicated region
    $region26: #{tpu_custom_call.1} parent=1 // pred_check
      _
    $region27: #{tpu_custom_call.1} parent=1 // pred_check_branch
      %66 = sbr.rel (0) target = $region29
    $region28: #{tpu_custom_call.1} parent=1 // pred_region
      %67 = dma.done [#allocation3], 1472
    $region29: #{tpu_custom_call.1} parent=1 // pred_fallthru
      _
    // Predicated region
    $region30: #{tpu_custom_call.1} parent=1 // pred_check
      _
    $region31: #{tpu_custom_call.1} parent=1 // pred_check_branch
      %69 = sbr.rel (0) target = $region33
    $region32: #{tpu_custom_call.1} parent=1 // pred_region
      %70 = dma.done [#allocation6], 23552
    $region33: #{tpu_custom_call.1} parent=1 // pred_fallthru
      _
    // Predicated region
    $region34: #{tpu_custom_call.1} parent=1 // pred_check
      _
    $region35: #{tpu_custom_call.1} parent=1 // pred_check_branch
      %72 = sbr.rel (0) target = $region37
    $region36: #{tpu_custom_call.1} parent=1 // pred_region
      %73 = dma.done [#allocation6], 1024
    $region37: #{tpu_custom_call.1} parent=1 // pred_fallthru
      _
    // Predicated region
    $region38: #{tpu_custom_call.1} parent=1 // pred_check
      _
    $region39: #{tpu_custom_call.1} parent=1 // pred_check_branch
      %75 = sbr.rel (0) target = $region41
    $region40: #{tpu_custom_call.1} parent=1 // pred_region
      %76 = dma.done [#allocation9], 1024
    $region41: #{tpu_custom_call.1} parent=1 // pred_fallthru
      _
    %v78 = vld [vmem:[#allocation2] sm:$0xff]
    %v79 = vld [vmem:[#allocation2 + $0x8] sm:$0xff]
    %v80 = vld [vmem:[#allocation2 + $0x10] sm:$0xff]
    %v81 = vld [vmem:[#allocation2 + $0x18] sm:$0xff]
    %v82 = vld [vmem:[#allocation2 + $0x20] sm:$0xff]
    %v83 = vld [vmem:[#allocation2 + $0x28] sm:$0xff]
    %v84 = vld [vmem:[#allocation2 + $0x30] sm:$0xff]
    %v85 = vld [vmem:[#allocation2 + $0x38] sm:$0xff]
    %v86 = vld [vmem:[#allocation2 + $0x40] sm:$0xff]
    %v87 = vld [vmem:[#allocation2 + $0x48] sm:$0xff]
    %v88 = vld [vmem:[#allocation2 + $0x50] sm:$0xff]
    %v89 = vld [vmem:[#allocation2 + $0x58] sm:$0xf]
    %v90 = vld [vmem:[#allocation5] sm:$0xf]
    %v91 = vld [vmem:[#allocation5 + $0x4] sm:$0xf]
    %v92 = vld [vmem:[#allocation5 + $0x8] sm:$0xf]
    %v93 = vld [vmem:[#allocation5 + $0xc] sm:$0xf]
    %v94 = vld [vmem:[#allocation5 + $0x10] sm:$0xf]
    %v95 = vld [vmem:[#allocation5 + $0x14] sm:$0xf]
    %v96 = vld [vmem:[#allocation5 + $0x18] sm:$0xf]
    %v97 = vld [vmem:[#allocation5 + $0x1c] sm:$0xf]
    %v98 = vld [vmem:[#allocation5 + $0x20] sm:$0xf]
    %v99 = vld [vmem:[#allocation5 + $0x24] sm:$0xf]
    %v100 = vld [vmem:[#allocation5 + $0x28] sm:$0xf]
    %v101 = vld [vmem:[#allocation5 + $0x2c] sm:$0xf]
    %v102 = vld [vmem:[#allocation5 + $0x30] sm:$0xf]
    %v103 = vld [vmem:[#allocation5 + $0x34] sm:$0xf]
    %v104 = vld [vmem:[#allocation5 + $0x38] sm:$0xf]
    %v105 = vld [vmem:[#allocation5 + $0x3c] sm:$0xf]
    %v106 = vld [vmem:[#allocation5 + $0x40] sm:$0xf]
    %v107 = vld [vmem:[#allocation5 + $0x44] sm:$0xf]
    %v108 = vld [vmem:[#allocation5 + $0x48] sm:$0xf]
    %v109 = vld [vmem:[#allocation5 + $0x4c] sm:$0xf]
    %v110 = vld [vmem:[#allocation5 + $0x50] sm:$0xf]
    %v111 = vld [vmem:[#allocation5 + $0x54] sm:$0xf]
    %v112 = vld [vmem:[#allocation5 + $0x58] sm:$0xf]
    %v113 = vld [vmem:[#allocation5 + $0x5c] sm:$0xf]
    %v114 = vld [vmem:[#allocation5 + $0x60] sm:$0xf]
    %v115 = vld [vmem:[#allocation5 + $0x64] sm:$0xf]
    %v116 = vld [vmem:[#allocation5 + $0x68] sm:$0xf]
    %v117 = vld [vmem:[#allocation5 + $0x6c] sm:$0xf]
    %v118 = vld [vmem:[#allocation5 + $0x70] sm:$0xf]
    %v119 = vld [vmem:[#allocation5 + $0x74] sm:$0xf]
    %v120 = vld [vmem:[#allocation5 + $0x78] sm:$0xf]
    %v121 = vld [vmem:[#allocation5 + $0x7c] sm:$0xf]
    %v122 = vld [vmem:[#allocation5 + $0x80] sm:$0xf]
    %v123 = vld [vmem:[#allocation5 + $0x84] sm:$0xf]
    %v124 = vld [vmem:[#allocation5 + $0x88] sm:$0xf]
    %v125 = vld [vmem:[#allocation5 + $0x8c] sm:$0xf]
    %v126 = vld [vmem:[#allocation5 + $0x90] sm:$0xf]
    %v127 = vld [vmem:[#allocation5 + $0x94] sm:$0xf]
    %v128 = vld [vmem:[#allocation5 + $0x98] sm:$0xf]
    %v129 = vld [vmem:[#allocation5 + $0x9c] sm:$0xf]
    %v130 = vld [vmem:[#allocation5 + $0xa0] sm:$0xf]
    %v131 = vld [vmem:[#allocation5 + $0xa4] sm:$0xf]
    %v132 = vld [vmem:[#allocation5 + $0xa8] sm:$0xf]
    %v133 = vld [vmem:[#allocation5 + $0xac] sm:$0xf]
    %v134 = vld [vmem:[#allocation5 + $0xb0] sm:$0xf]
    %v135 = vld [vmem:[#allocation5 + $0xb4] sm:$0xf]
    %v136 = vld [vmem:[#allocation5 + $0xb8] sm:$0xf]
    %v137 = vld [vmem:[#allocation5 + $0xbc] sm:$0xf]
    %v138 = vld [vmem:[#allocation5 + $0xc0] sm:$0xf]
    %v139 = vld [vmem:[#allocation5 + $0xc4] sm:$0xf]
    %v140 = vld [vmem:[#allocation5 + $0xc8] sm:$0xf]
    %v141 = vld [vmem:[#allocation5 + $0xcc] sm:$0xf]
    %v142 = vld [vmem:[#allocation5 + $0xd0] sm:$0xf]
    %v143 = vld [vmem:[#allocation5 + $0xd4] sm:$0xf]
    %v144 = vld [vmem:[#allocation5 + $0xd8] sm:$0xf]
    %v145 = vld [vmem:[#allocation5 + $0xdc] sm:$0xf]
    %v146 = vld [vmem:[#allocation5 + $0xe0] sm:$0xf]
    %v147 = vld [vmem:[#allocation5 + $0xe4] sm:$0xf]
    %v148 = vld [vmem:[#allocation5 + $0xe8] sm:$0xf]
    %v149 = vld [vmem:[#allocation5 + $0xec] sm:$0xf]
    %v150 = vld [vmem:[#allocation5 + $0xf0] sm:$0xf]
    %v151 = vld [vmem:[#allocation5 + $0xf4] sm:$0xf]
    %v152 = vld [vmem:[#allocation5 + $0xf8] sm:$0xf]
    %v153 = vld [vmem:[#allocation5 + $0xfc] sm:$0xf]
    %v154 = vld [vmem:[#allocation5 + $0x100] sm:$0xf]
    %v155 = vld [vmem:[#allocation5 + $0x104] sm:$0xf]
    %v156 = vld [vmem:[#allocation5 + $0x108] sm:$0xf]
    %v157 = vld [vmem:[#allocation5 + $0x10c] sm:$0xf]
    %v158 = vld [vmem:[#allocation5 + $0x110] sm:$0xf]
    %v159 = vld [vmem:[#allocation5 + $0x114] sm:$0xf]
    %v160 = vld [vmem:[#allocation5 + $0x118] sm:$0xf]
    %v161 = vld [vmem:[#allocation5 + $0x11c] sm:$0xf]
    %v162 = vld [vmem:[#allocation5 + $0x120] sm:$0xf]
    %v163 = vld [vmem:[#allocation5 + $0x124] sm:$0xf]
    %v164 = vld [vmem:[#allocation5 + $0x128] sm:$0xf]
    %v165 = vld [vmem:[#allocation5 + $0x12c] sm:$0xf]
    %v166 = vld [vmem:[#allocation5 + $0x130] sm:$0xf]
    %v167 = vld [vmem:[#allocation5 + $0x134] sm:$0xf]
    %v168 = vld [vmem:[#allocation5 + $0x138] sm:$0xf]
    %v169 = vld [vmem:[#allocation5 + $0x13c] sm:$0xf]
    %v170 = vld [vmem:[#allocation5 + $0x140] sm:$0xf]
    %v171 = vld [vmem:[#allocation5 + $0x144] sm:$0xf]
    %v172 = vld [vmem:[#allocation5 + $0x148] sm:$0xf]
    %v173 = vld [vmem:[#allocation5 + $0x14c] sm:$0xf]
    %v174 = vld [vmem:[#allocation5 + $0x150] sm:$0xf]
    %v175 = vld [vmem:[#allocation5 + $0x154] sm:$0xf]
    %v176 = vld [vmem:[#allocation5 + $0x158] sm:$0xf]
    %v177 = vld [vmem:[#allocation5 + $0x15c] sm:$0xf]
    %v178 = vld [vmem:[#allocation5 + $0x160] sm:$0xf]
    %v179 = vld [vmem:[#allocation5 + $0x164] sm:$0xf]
    %v180 = vld [vmem:[#allocation5 + $0x168] sm:$0xf]
    %v181 = vld [vmem:[#allocation5 + $0x16c] sm:$0xf]
    %v182 = vld [vmem:[#allocation5 + $0x170] sm:$0xf]
    %v183 = vld [vmem:[#allocation5 + $0x174] sm:$0xf]
    %v184 = vld [vmem:[#allocation5 + $0x178] sm:$0xf]
    %v185 = vld [vmem:[#allocation5 + $0x17c] sm:$0xf]
    %v186 = vld [vmem:[#allocation5 + $0x180] sm:$0xf]
    %v187 = vld [vmem:[#allocation5 + $0x184] sm:$0xf]
    %v188 = vld [vmem:[#allocation5 + $0x188] sm:$0xf]
    %v189 = vld [vmem:[#allocation5 + $0x18c] sm:$0xf]
    %v190 = vld [vmem:[#allocation5 + $0x190] sm:$0xf]
    %v191 = vld [vmem:[#allocation5 + $0x194] sm:$0xf]
    %v192 = vld [vmem:[#allocation5 + $0x198] sm:$0xf]
    %v193 = vld [vmem:[#allocation5 + $0x19c] sm:$0xf]
    %v194 = vld [vmem:[#allocation5 + $0x1a0] sm:$0xf]
    %v195 = vld [vmem:[#allocation5 + $0x1a4] sm:$0xf]
    %v196 = vld [vmem:[#allocation5 + $0x1a8] sm:$0xf]
    %v197 = vld [vmem:[#allocation5 + $0x1ac] sm:$0xf]
    %v198 = vld [vmem:[#allocation5 + $0x1b0] sm:$0xf]
    %v199 = vld [vmem:[#allocation5 + $0x1b4] sm:$0xf]
    %v200 = vld [vmem:[#allocation5 + $0x1b8] sm:$0xf]
    %v201 = vld [vmem:[#allocation5 + $0x1bc] sm:$0xf]
    %v202 = vld [vmem:[#allocation5 + $0x1c0] sm:$0xf]
    %v203 = vld [vmem:[#allocation5 + $0x1c4] sm:$0xf]
    %v204 = vld [vmem:[#allocation5 + $0x1c8] sm:$0xf]
    %v205 = vld [vmem:[#allocation5 + $0x1cc] sm:$0xf]
    %v206 = vld [vmem:[#allocation5 + $0x1d0] sm:$0xf]
    %v207 = vld [vmem:[#allocation5 + $0x1d4] sm:$0xf]
    %v208 = vld [vmem:[#allocation5 + $0x1d8] sm:$0xf]
    %v209 = vld [vmem:[#allocation5 + $0x1dc] sm:$0xf]
    %v210 = vld [vmem:[#allocation5 + $0x1e0] sm:$0xf]
    %v211 = vld [vmem:[#allocation5 + $0x1e4] sm:$0xf]
    %v212 = vld [vmem:[#allocation5 + $0x1e8] sm:$0xf]
    %v213 = vld [vmem:[#allocation5 + $0x1ec] sm:$0xf]
    %v214 = vld [vmem:[#allocation5 + $0x1f0] sm:$0xf]
    %v215 = vld [vmem:[#allocation5 + $0x1f4] sm:$0xf]
    %v216 = vld [vmem:[#allocation5 + $0x1f8] sm:$0xf]
    %v217 = vld [vmem:[#allocation5 + $0x1fc] sm:$0xf]
    %v218 = vld [vmem:[#allocation5 + $0x200] sm:$0xf]
    %v219 = vld [vmem:[#allocation5 + $0x204] sm:$0xf]
    %v220 = vld [vmem:[#allocation5 + $0x208] sm:$0xf]
    %v221 = vld [vmem:[#allocation5 + $0x20c] sm:$0xf]
    %v222 = vld [vmem:[#allocation5 + $0x210] sm:$0xf]
    %v223 = vld [vmem:[#allocation5 + $0x214] sm:$0xf]
    %v224 = vld [vmem:[#allocation5 + $0x218] sm:$0xf]
    %v225 = vld [vmem:[#allocation5 + $0x21c] sm:$0xf]
    %v226 = vld [vmem:[#allocation5 + $0x220] sm:$0xf]
    %v227 = vld [vmem:[#allocation5 + $0x224] sm:$0xf]
    %v228 = vld [vmem:[#allocation5 + $0x228] sm:$0xf]
    %v229 = vld [vmem:[#allocation5 + $0x22c] sm:$0xf]
    %v230 = vld [vmem:[#allocation5 + $0x230] sm:$0xf]
    %v231 = vld [vmem:[#allocation5 + $0x234] sm:$0xf]
    %v232 = vld [vmem:[#allocation5 + $0x238] sm:$0xf]
    %v233 = vld [vmem:[#allocation5 + $0x23c] sm:$0xf]
    %v234 = vld [vmem:[#allocation5 + $0x240] sm:$0xf]
    %v235 = vld [vmem:[#allocation5 + $0x244] sm:$0xf]
    %v236 = vld [vmem:[#allocation5 + $0x248] sm:$0xf]
    %v237 = vld [vmem:[#allocation5 + $0x24c] sm:$0xf]
    %v238 = vld [vmem:[#allocation5 + $0x250] sm:$0xf]
    %v239 = vld [vmem:[#allocation5 + $0x254] sm:$0xf]
    %v240 = vld [vmem:[#allocation5 + $0x258] sm:$0xf]
    %v241 = vld [vmem:[#allocation5 + $0x25c] sm:$0xf]
    %v242 = vld [vmem:[#allocation5 + $0x260] sm:$0xf]
    %v243 = vld [vmem:[#allocation5 + $0x264] sm:$0xf]
    %v244 = vld [vmem:[#allocation5 + $0x268] sm:$0xf]
    %v245 = vld [vmem:[#allocation5 + $0x26c] sm:$0xf]
    %v246 = vld [vmem:[#allocation5 + $0x270] sm:$0xf]
    %v247 = vld [vmem:[#allocation5 + $0x274] sm:$0xf]
    %v248 = vld [vmem:[#allocation5 + $0x278] sm:$0xf]
    %v249 = vld [vmem:[#allocation5 + $0x27c] sm:$0xf]
    %v250 = vld [vmem:[#allocation5 + $0x280] sm:$0xf]
    %v251 = vld [vmem:[#allocation5 + $0x284] sm:$0xf]
    %v252 = vld [vmem:[#allocation5 + $0x288] sm:$0xf]
    %v253 = vld [vmem:[#allocation5 + $0x28c] sm:$0xf]
    %v254 = vld [vmem:[#allocation5 + $0x290] sm:$0xf]
    %v255 = vld [vmem:[#allocation5 + $0x294] sm:$0xf]
    %v256 = vld [vmem:[#allocation5 + $0x298] sm:$0xf]
    %v257 = vld [vmem:[#allocation5 + $0x29c] sm:$0xf]
    %v258 = vld [vmem:[#allocation5 + $0x2a0] sm:$0xf]
    %v259 = vld [vmem:[#allocation5 + $0x2a4] sm:$0xf]
    %v260 = vld [vmem:[#allocation5 + $0x2a8] sm:$0xf]
    %v261 = vld [vmem:[#allocation5 + $0x2ac] sm:$0xf]
    %v262 = vld [vmem:[#allocation5 + $0x2b0] sm:$0xf]
    %v263 = vld [vmem:[#allocation5 + $0x2b4] sm:$0xf]
    %v264 = vld [vmem:[#allocation5 + $0x2b8] sm:$0xf]
    %v265 = vld [vmem:[#allocation5 + $0x2bc] sm:$0xf]
    %v266 = vld [vmem:[#allocation5 + $0x2c0] sm:$0xf]
    %v267 = vld [vmem:[#allocation5 + $0x2c4] sm:$0xf]
    %v268 = vld [vmem:[#allocation5 + $0x2c8] sm:$0xf]
    %v269 = vld [vmem:[#allocation5 + $0x2cc] sm:$0xf]
    %v270 = vld [vmem:[#allocation5 + $0x2d0] sm:$0xf]
    %v271 = vld [vmem:[#allocation5 + $0x2d4] sm:$0xf]
    %v272 = vld [vmem:[#allocation5 + $0x2d8] sm:$0xf]
    %v273 = vld [vmem:[#allocation5 + $0x2dc] sm:$0xf]
    %v274 = vld [vmem:[#allocation5 + $0x2e0] sm:$0xf]
    %v275 = vld [vmem:[#allocation5 + $0x2e4] sm:$0xf]
    %v276 = vld [vmem:[#allocation5 + $0x2e8] sm:$0xf]
    %v277 = vld [vmem:[#allocation5 + $0x2ec] sm:$0xf]
    %v278 = vld [vmem:[#allocation5 + $0x2f0] sm:$0xf]
    %v279 = vld [vmem:[#allocation5 + $0x2f4] sm:$0xf]
    %v280 = vld [vmem:[#allocation5 + $0x2f8] sm:$0xf]
    %v281 = vld [vmem:[#allocation5 + $0x2fc] sm:$0xf]
    %v282 = vld [vmem:[#allocation5 + $0x300] sm:$0xf]
    %v283 = vld [vmem:[#allocation5 + $0x304] sm:$0xf]
    %v284 = vld [vmem:[#allocation5 + $0x308] sm:$0xf]
    %v285 = vld [vmem:[#allocation5 + $0x30c] sm:$0xf]
    %v286 = vld [vmem:[#allocation5 + $0x310] sm:$0xf]
    %v287 = vld [vmem:[#allocation5 + $0x314] sm:$0xf]
    %v288 = vld [vmem:[#allocation5 + $0x318] sm:$0xf]
    %v289 = vld [vmem:[#allocation5 + $0x31c] sm:$0xf]
    %v290 = vld [vmem:[#allocation5 + $0x320] sm:$0xf]
    %v291 = vld [vmem:[#allocation5 + $0x324] sm:$0xf]
    %v292 = vld [vmem:[#allocation5 + $0x328] sm:$0xf]
    %v293 = vld [vmem:[#allocation5 + $0x32c] sm:$0xf]
    %v294 = vld [vmem:[#allocation5 + $0x330] sm:$0xf]
    %v295 = vld [vmem:[#allocation5 + $0x334] sm:$0xf]
    %v296 = vld [vmem:[#allocation5 + $0x338] sm:$0xf]
    %v297 = vld [vmem:[#allocation5 + $0x33c] sm:$0xf]
    %v298 = vld [vmem:[#allocation5 + $0x340] sm:$0xf]
    %v299 = vld [vmem:[#allocation5 + $0x344] sm:$0xf]
    %v300 = vld [vmem:[#allocation5 + $0x348] sm:$0xf]
    %v301 = vld [vmem:[#allocation5 + $0x34c] sm:$0xf]
    %v302 = vld [vmem:[#allocation5 + $0x350] sm:$0xf]
    %v303 = vld [vmem:[#allocation5 + $0x354] sm:$0xf]
    %v304 = vld [vmem:[#allocation5 + $0x358] sm:$0xf]
    %v305 = vld [vmem:[#allocation5 + $0x35c] sm:$0xf]
    %v306 = vld [vmem:[#allocation5 + $0x360] sm:$0xf]
    %v307 = vld [vmem:[#allocation5 + $0x364] sm:$0xf]
    %v308 = vld [vmem:[#allocation5 + $0x368] sm:$0xf]
    %v309 = vld [vmem:[#allocation5 + $0x36c] sm:$0xf]
    %v310 = vld [vmem:[#allocation5 + $0x370] sm:$0xf]
    %v311 = vld [vmem:[#allocation5 + $0x374] sm:$0xf]
    %v312 = vld [vmem:[#allocation5 + $0x378] sm:$0xf]
    %v313 = vld [vmem:[#allocation5 + $0x37c] sm:$0xf]
    %v314 = vld [vmem:[#allocation5 + $0x380] sm:$0xf]
    %v315 = vld [vmem:[#allocation5 + $0x384] sm:$0xf]
    %v316 = vld [vmem:[#allocation5 + $0x388] sm:$0xf]
    %v317 = vld [vmem:[#allocation5 + $0x38c] sm:$0xf]
    %v318 = vld [vmem:[#allocation5 + $0x390] sm:$0xf]
    %v319 = vld [vmem:[#allocation5 + $0x394] sm:$0xf]
    %v320 = vld [vmem:[#allocation5 + $0x398] sm:$0xf]
    %v321 = vld [vmem:[#allocation5 + $0x39c] sm:$0xf]
    %v322 = vld [vmem:[#allocation5 + $0x3a0] sm:$0xf]
    %v323 = vld [vmem:[#allocation5 + $0x3a4] sm:$0xf]
    %v324 = vld [vmem:[#allocation5 + $0x3a8] sm:$0xf]
    %v325 = vld [vmem:[#allocation5 + $0x3ac] sm:$0xf]
    %v326 = vld [vmem:[#allocation5 + $0x3b0] sm:$0xf]
    %v327 = vld [vmem:[#allocation5 + $0x3b4] sm:$0xf]
    %v328 = vld [vmem:[#allocation5 + $0x3b8] sm:$0xf]
    %v329 = vld [vmem:[#allocation5 + $0x3bc] sm:$0xf]
    %v330 = vld [vmem:[#allocation5 + $0x3c0] sm:$0xf]
    %v331 = vld [vmem:[#allocation5 + $0x3c4] sm:$0xf]
    %v332 = vld [vmem:[#allocation5 + $0x3c8] sm:$0xf]
    %v333 = vld [vmem:[#allocation5 + $0x3cc] sm:$0xf]
    %v334 = vld [vmem:[#allocation5 + $0x3d0] sm:$0xf]
    %v335 = vld [vmem:[#allocation5 + $0x3d4] sm:$0xf]
    %v336 = vld [vmem:[#allocation5 + $0x3d8] sm:$0xf]
    %v337 = vld [vmem:[#allocation5 + $0x3dc] sm:$0xf]
    %v338 = vld [vmem:[#allocation5 + $0x3e0] sm:$0xf]
    %v339 = vld [vmem:[#allocation5 + $0x3e4] sm:$0xf]
    %v340 = vld [vmem:[#allocation5 + $0x3e8] sm:$0xf]
    %v341 = vld [vmem:[#allocation5 + $0x3ec] sm:$0xf]
    %v342 = vld [vmem:[#allocation5 + $0x3f0] sm:$0xf]
    %v343 = vld [vmem:[#allocation5 + $0x3f4] sm:$0xf]
    %v344 = vld [vmem:[#allocation5 + $0x3f8] sm:$0xf]
    %v345 = vld [vmem:[#allocation5 + $0x3fc] sm:$0xf]
    %v346 = vld [vmem:[#allocation5 + $0x400] sm:$0xf]
    %v347 = vld [vmem:[#allocation5 + $0x404] sm:$0xf]
    %v348 = vld [vmem:[#allocation5 + $0x408] sm:$0xf]
    %v349 = vld [vmem:[#allocation5 + $0x40c] sm:$0xf]
    %v350 = vld [vmem:[#allocation5 + $0x410] sm:$0xf]
    %v351 = vld [vmem:[#allocation5 + $0x414] sm:$0xf]
    %v352 = vld [vmem:[#allocation5 + $0x418] sm:$0xf]
    %v353 = vld [vmem:[#allocation5 + $0x41c] sm:$0xf]
    %v354 = vld [vmem:[#allocation5 + $0x420] sm:$0xf]
    %v355 = vld [vmem:[#allocation5 + $0x424] sm:$0xf]
    %v356 = vld [vmem:[#allocation5 + $0x428] sm:$0xf]
    %v357 = vld [vmem:[#allocation5 + $0x42c] sm:$0xf]
    %v358 = vld [vmem:[#allocation5 + $0x430] sm:$0xf]
    %v359 = vld [vmem:[#allocation5 + $0x434] sm:$0xf]
    %v360 = vld [vmem:[#allocation5 + $0x438] sm:$0xf]
    %v361 = vld [vmem:[#allocation5 + $0x43c] sm:$0xf]
    %v362 = vld [vmem:[#allocation5 + $0x440] sm:$0xf]
    %v363 = vld [vmem:[#allocation5 + $0x444] sm:$0xf]
    %v364 = vld [vmem:[#allocation5 + $0x448] sm:$0xf]
    %v365 = vld [vmem:[#allocation5 + $0x44c] sm:$0xf]
    %v366 = vld [vmem:[#allocation5 + $0x450] sm:$0xf]
    %v367 = vld [vmem:[#allocation5 + $0x454] sm:$0xf]
    %v368 = vld [vmem:[#allocation5 + $0x458] sm:$0xf]
    %v369 = vld [vmem:[#allocation5 + $0x45c] sm:$0xf]
    %v370 = vld [vmem:[#allocation5 + $0x460] sm:$0xf]
    %v371 = vld [vmem:[#allocation5 + $0x464] sm:$0xf]
    %v372 = vld [vmem:[#allocation5 + $0x468] sm:$0xf]
    %v373 = vld [vmem:[#allocation5 + $0x46c] sm:$0xf]
    %v374 = vld [vmem:[#allocation5 + $0x470] sm:$0xf]
    %v375 = vld [vmem:[#allocation5 + $0x474] sm:$0xf]
    %v376 = vld [vmem:[#allocation5 + $0x478] sm:$0xf]
    %v377 = vld [vmem:[#allocation5 + $0x47c] sm:$0xf]
    %v378 = vld [vmem:[#allocation5 + $0x480] sm:$0xf]
    %v379 = vld [vmem:[#allocation5 + $0x484] sm:$0xf]
    %v380 = vld [vmem:[#allocation5 + $0x488] sm:$0xf]
    %v381 = vld [vmem:[#allocation5 + $0x48c] sm:$0xf]
    %v382 = vld [vmem:[#allocation5 + $0x490] sm:$0xf]
    %v383 = vld [vmem:[#allocation5 + $0x494] sm:$0xf]
    %v384 = vld [vmem:[#allocation5 + $0x498] sm:$0xf]
    %v385 = vld [vmem:[#allocation5 + $0x49c] sm:$0xf]
    %v386 = vld [vmem:[#allocation5 + $0x4a0] sm:$0xf]
    %v387 = vld [vmem:[#allocation5 + $0x4a4] sm:$0xf]
    %v388 = vld [vmem:[#allocation5 + $0x4a8] sm:$0xf]
    %v389 = vld [vmem:[#allocation5 + $0x4ac] sm:$0xf]
    %v390 = vld [vmem:[#allocation5 + $0x4b0] sm:$0xf]
    %v391 = vld [vmem:[#allocation5 + $0x4b4] sm:$0xf]
    %v392 = vld [vmem:[#allocation5 + $0x4b8] sm:$0xf]
    %v393 = vld [vmem:[#allocation5 + $0x4bc] sm:$0xf]
    %v394 = vld [vmem:[#allocation5 + $0x4c0] sm:$0xf]
    %v395 = vld [vmem:[#allocation5 + $0x4c4] sm:$0xf]
    %v396 = vld [vmem:[#allocation5 + $0x4c8] sm:$0xf]
    %v397 = vld [vmem:[#allocation5 + $0x4cc] sm:$0xf]
    %v398 = vld [vmem:[#allocation5 + $0x4d0] sm:$0xf]
    %v399 = vld [vmem:[#allocation5 + $0x4d4] sm:$0xf]
    %v400 = vld [vmem:[#allocation5 + $0x4d8] sm:$0xf]
    %v401 = vld [vmem:[#allocation5 + $0x4dc] sm:$0xf]
    %v402 = vld [vmem:[#allocation5 + $0x4e0] sm:$0xf]
    %v403 = vld [vmem:[#allocation5 + $0x4e4] sm:$0xf]
    %v404 = vld [vmem:[#allocation5 + $0x4e8] sm:$0xf]
    %v405 = vld [vmem:[#allocation5 + $0x4ec] sm:$0xf]
    %v406 = vld [vmem:[#allocation5 + $0x4f0] sm:$0xf]
    %v407 = vld [vmem:[#allocation5 + $0x4f4] sm:$0xf]
    %v408 = vld [vmem:[#allocation5 + $0x4f8] sm:$0xf]
    %v409 = vld [vmem:[#allocation5 + $0x4fc] sm:$0xf]
    %v410 = vld [vmem:[#allocation5 + $0x500] sm:$0xf]
    %v411 = vld [vmem:[#allocation5 + $0x504] sm:$0xf]
    %v412 = vld [vmem:[#allocation5 + $0x508] sm:$0xf]
    %v413 = vld [vmem:[#allocation5 + $0x50c] sm:$0xf]
    %v414 = vld [vmem:[#allocation5 + $0x510] sm:$0xf]
    %v415 = vld [vmem:[#allocation5 + $0x514] sm:$0xf]
    %v416 = vld [vmem:[#allocation5 + $0x518] sm:$0xf]
    %v417 = vld [vmem:[#allocation5 + $0x51c] sm:$0xf]
    %v418 = vld [vmem:[#allocation5 + $0x520] sm:$0xf]
    %v419 = vld [vmem:[#allocation5 + $0x524] sm:$0xf]
    %v420 = vld [vmem:[#allocation5 + $0x528] sm:$0xf]
    %v421 = vld [vmem:[#allocation5 + $0x52c] sm:$0xf]
    %v422 = vld [vmem:[#allocation5 + $0x530] sm:$0xf]
    %v423 = vld [vmem:[#allocation5 + $0x534] sm:$0xf]
    %v424 = vld [vmem:[#allocation5 + $0x538] sm:$0xf]
    %v425 = vld [vmem:[#allocation5 + $0x53c] sm:$0xf]
    %v426 = vld [vmem:[#allocation5 + $0x540] sm:$0xf]
    %v427 = vld [vmem:[#allocation5 + $0x544] sm:$0xf]
    %v428 = vld [vmem:[#allocation5 + $0x548] sm:$0xf]
    %v429 = vld [vmem:[#allocation5 + $0x54c] sm:$0xf]
    %v430 = vld [vmem:[#allocation5 + $0x550] sm:$0xf]
    %v431 = vld [vmem:[#allocation5 + $0x554] sm:$0xf]
    %v432 = vld [vmem:[#allocation5 + $0x558] sm:$0xf]
    %v433 = vld [vmem:[#allocation5 + $0x55c] sm:$0xf]
    %v434 = vld [vmem:[#allocation5 + $0x560] sm:$0xf]
    %v435 = vld [vmem:[#allocation5 + $0x564] sm:$0xf]
    %v436 = vld [vmem:[#allocation5 + $0x568] sm:$0xf]
    %v437 = vld [vmem:[#allocation5 + $0x56c] sm:$0xf]
    %v438 = vld [vmem:[#allocation5 + $0x570] sm:$0xf]
    %v439 = vld [vmem:[#allocation5 + $0x574] sm:$0xf]
    %v440 = vld [vmem:[#allocation5 + $0x578] sm:$0xf]
    %v441 = vld [vmem:[#allocation5 + $0x57c] sm:$0xf]
    %v442 = vld [vmem:[#allocation5 + $0x580] sm:$0xf]
    %v443 = vld [vmem:[#allocation5 + $0x584] sm:$0xf]
    %v444 = vld [vmem:[#allocation5 + $0x588] sm:$0xf]
    %v445 = vld [vmem:[#allocation5 + $0x58c] sm:$0xf]
    %v446 = vld [vmem:[#allocation5 + $0x590] sm:$0xf]
    %v447 = vld [vmem:[#allocation5 + $0x594] sm:$0xf]
    %v448 = vld [vmem:[#allocation5 + $0x598] sm:$0xf]
    %v449 = vld [vmem:[#allocation5 + $0x59c] sm:$0xf]
    %v450 = vld [vmem:[#allocation5 + $0x5a0] sm:$0xf]
    %v451 = vld [vmem:[#allocation5 + $0x5a4] sm:$0xf]
    %v452 = vld [vmem:[#allocation5 + $0x5a8] sm:$0xf]
    %v453 = vld [vmem:[#allocation5 + $0x5ac] sm:$0xf]
    %v454 = vld [vmem:[#allocation5 + $0x5b0] sm:$0xf]
    %v455 = vld [vmem:[#allocation5 + $0x5b4] sm:$0xf]
    %v456 = vld [vmem:[#allocation5 + $0x5b8] sm:$0xf]
    %v457 = vld [vmem:[#allocation5 + $0x5bc] sm:$0xf]
    %v458 = vld [vmem:[%s2] sm:$0x1]
    %v460 = vlaneseq
    %v461 = vshrl.u32 %v460, 7
    %v462 = vsub.s32 0, %v461
    %v463 = vrot.slane %v458, %v462
    %v477 = vunpack.c.l.b16 %v78
    %v478 = vunpack.c.h.b16 %v78
    %v479 = vunpack.c.l.b16 %v79
    %v480 = vunpack.c.h.b16 %v79
    %v481 = vunpack.c.l.b16 %v80
    %v482 = vunpack.c.h.b16 %v80
    %v483 = vunpack.c.l.b16 %v81
    %v484 = vunpack.c.h.b16 %v81
    %v485 = vunpack.c.l.b16 %v82
    %v486 = vunpack.c.h.b16 %v82
    %v487 = vunpack.c.l.b16 %v83
    %v488 = vunpack.c.h.b16 %v83
    %v489 = vunpack.c.l.b16 %v84
    %v490 = vunpack.c.h.b16 %v84
    %v491 = vunpack.c.l.b16 %v85
    %v492 = vunpack.c.h.b16 %v85
    %v493 = vunpack.c.l.b16 %v86
    %v494 = vunpack.c.h.b16 %v86
    %v495 = vunpack.c.l.b16 %v87
    %v496 = vunpack.c.h.b16 %v87
    %v497 = vunpack.c.l.b16 %v88
    %v498 = vunpack.c.h.b16 %v88
    %v499 = vunpack.c.l.b16 %v89
    %v500 = vpack.c.b16 %v477, %v477
    %v501 = vpack.c.b16 %v478, %v478
    %v502 = vpack.c.b16 %v479, %v479
    %v503 = vpack.c.b16 %v480, %v480
    %v504 = vpack.c.b16 %v481, %v481
    %v505 = vpack.c.b16 %v482, %v482
    %v506 = vpack.c.b16 %v483, %v483
    %v507 = vpack.c.b16 %v484, %v484
    %v508 = vpack.c.b16 %v485, %v485
    %v509 = vpack.c.b16 %v486, %v486
    %v510 = vpack.c.b16 %v487, %v487
    %v511 = vpack.c.b16 %v488, %v488
    %v512 = vpack.c.b16 %v489, %v489
    %v513 = vpack.c.b16 %v490, %v490
    %v514 = vpack.c.b16 %v491, %v491
    %v515 = vpack.c.b16 %v492, %v492
    %v516 = vpack.c.b16 %v493, %v493
    %v517 = vpack.c.b16 %v494, %v494
    %v518 = vpack.c.b16 %v495, %v495
    %v519 = vpack.c.b16 %v496, %v496
    %v520 = vpack.c.b16 %v497, %v497
    %v521 = vpack.c.b16 %v498, %v498
    %v522 = vpack.c.b16 %v499, %v499
    %v914 = vunpack.c.l.b16 %v90
    %v915 = vunpack.c.l.b16 %v91
    %v916 = vunpack.c.l.b16 %v92
    %v917 = vunpack.c.l.b16 %v93
    %v918 = vunpack.c.l.b16 %v94
    %v919 = vunpack.c.l.b16 %v95
    %v920 = vunpack.c.l.b16 %v96
    %v921 = vunpack.c.l.b16 %v97
    %v922 = vunpack.c.l.b16 %v98
    %v923 = vunpack.c.l.b16 %v99
    %v924 = vunpack.c.l.b16 %v100
    %v925 = vunpack.c.l.b16 %v101
    %v926 = vunpack.c.l.b16 %v102
    %v927 = vunpack.c.l.b16 %v103
    %v928 = vunpack.c.l.b16 %v104
    %v929 = vunpack.c.l.b16 %v105
    %v930 = vunpack.c.l.b16 %v106
    %v931 = vunpack.c.l.b16 %v107
    %v932 = vunpack.c.l.b16 %v108
    %v933 = vunpack.c.l.b16 %v109
    %v934 = vunpack.c.l.b16 %v110
    %v935 = vunpack.c.l.b16 %v111
    %v936 = vunpack.c.l.b16 %v112
    %v937 = vunpack.c.l.b16 %v113
    %v938 = vunpack.c.l.b16 %v114
    %v939 = vunpack.c.l.b16 %v115
    %v940 = vunpack.c.l.b16 %v116
    %v941 = vunpack.c.l.b16 %v117
    %v942 = vunpack.c.l.b16 %v118
    %v943 = vunpack.c.l.b16 %v119
    %v944 = vunpack.c.l.b16 %v120
    %v945 = vunpack.c.l.b16 %v121
    %v946 = vunpack.c.l.b16 %v122
    %v947 = vunpack.c.l.b16 %v123
    %v948 = vunpack.c.l.b16 %v124
    %v949 = vunpack.c.l.b16 %v125
    %v950 = vunpack.c.l.b16 %v126
    %v951 = vunpack.c.l.b16 %v127
    %v952 = vunpack.c.l.b16 %v128
    %v953 = vunpack.c.l.b16 %v129
    %v954 = vunpack.c.l.b16 %v130
    %v955 = vunpack.c.l.b16 %v131
    %v956 = vunpack.c.l.b16 %v132
    %v957 = vunpack.c.l.b16 %v133
    %v958 = vunpack.c.l.b16 %v134
    %v959 = vunpack.c.l.b16 %v135
    %v960 = vunpack.c.l.b16 %v136
    %v961 = vunpack.c.l.b16 %v137
    %v962 = vunpack.c.l.b16 %v138
    %v963 = vunpack.c.l.b16 %v139
    %v964 = vunpack.c.l.b16 %v140
    %v965 = vunpack.c.l.b16 %v141
    %v966 = vunpack.c.l.b16 %v142
    %v967 = vunpack.c.l.b16 %v143
    %v968 = vunpack.c.l.b16 %v144
    %v969 = vunpack.c.l.b16 %v145
    %v970 = vunpack.c.l.b16 %v146
    %v971 = vunpack.c.l.b16 %v147
    %v972 = vunpack.c.l.b16 %v148
    %v973 = vunpack.c.l.b16 %v149
    %v974 = vunpack.c.l.b16 %v150
    %v975 = vunpack.c.l.b16 %v151
    %v976 = vunpack.c.l.b16 %v152
    %v977 = vunpack.c.l.b16 %v153
    %v978 = vunpack.c.l.b16 %v154
    %v979 = vunpack.c.l.b16 %v155
    %v980 = vunpack.c.l.b16 %v156
    %v981 = vunpack.c.l.b16 %v157
    %v982 = vunpack.c.l.b16 %v158
    %v983 = vunpack.c.l.b16 %v159
    %v984 = vunpack.c.l.b16 %v160
    %v985 = vunpack.c.l.b16 %v161
    %v986 = vunpack.c.l.b16 %v162
    %v987 = vunpack.c.l.b16 %v163
    %v988 = vunpack.c.l.b16 %v164
    %v989 = vunpack.c.l.b16 %v165
    %v990 = vunpack.c.l.b16 %v166
    %v991 = vunpack.c.l.b16 %v167
    %v992 = vunpack.c.l.b16 %v168
    %v993 = vunpack.c.l.b16 %v169
    %v994 = vunpack.c.l.b16 %v170
    %v995 = vunpack.c.l.b16 %v171
    %v996 = vunpack.c.l.b16 %v172
    %v997 = vunpack.c.l.b16 %v173
    %v998 = vunpack.c.l.b16 %v174
    %v999 = vunpack.c.l.b16 %v175
    %v1000 = vunpack.c.l.b16 %v176
    %v1001 = vunpack.c.l.b16 %v177
    %v1002 = vunpack.c.l.b16 %v178
    %v1003 = vunpack.c.l.b16 %v179
    %v1004 = vunpack.c.l.b16 %v180
    %v1005 = vunpack.c.l.b16 %v181
    %v1006 = vunpack.c.l.b16 %v182
    %v1007 = vunpack.c.l.b16 %v183
    %v1008 = vunpack.c.l.b16 %v184
    %v1009 = vunpack.c.l.b16 %v185
    %v1010 = vunpack.c.l.b16 %v186
    %v1011 = vunpack.c.l.b16 %v187
    %v1012 = vunpack.c.l.b16 %v188
    %v1013 = vunpack.c.l.b16 %v189
    %v1014 = vunpack.c.l.b16 %v190
    %v1015 = vunpack.c.l.b16 %v191
    %v1016 = vunpack.c.l.b16 %v192
    %v1017 = vunpack.c.l.b16 %v193
    %v1018 = vunpack.c.l.b16 %v194
    %v1019 = vunpack.c.l.b16 %v195
    %v1020 = vunpack.c.l.b16 %v196
    %v1021 = vunpack.c.l.b16 %v197
    %v1022 = vunpack.c.l.b16 %v198
    %v1023 = vunpack.c.l.b16 %v199
    %v1024 = vunpack.c.l.b16 %v200
    %v1025 = vunpack.c.l.b16 %v201
    %v1026 = vunpack.c.l.b16 %v202
    %v1027 = vunpack.c.l.b16 %v203
    %v1028 = vunpack.c.l.b16 %v204
    %v1029 = vunpack.c.l.b16 %v205
    %v1030 = vunpack.c.l.b16 %v206
    %v1031 = vunpack.c.l.b16 %v207
    %v1032 = vunpack.c.l.b16 %v208
    %v1033 = vunpack.c.l.b16 %v209
    %v1034 = vunpack.c.l.b16 %v210
    %v1035 = vunpack.c.l.b16 %v211
    %v1036 = vunpack.c.l.b16 %v212
    %v1037 = vunpack.c.l.b16 %v213
    %v1038 = vunpack.c.l.b16 %v214
    %v1039 = vunpack.c.l.b16 %v215
    %v1040 = vunpack.c.l.b16 %v216
    %v1041 = vunpack.c.l.b16 %v217
    %v1042 = vunpack.c.l.b16 %v218
    %v1043 = vunpack.c.l.b16 %v219
    %v1044 = vunpack.c.l.b16 %v220
    %v1045 = vunpack.c.l.b16 %v221
    %v1046 = vunpack.c.l.b16 %v222
    %v1047 = vunpack.c.l.b16 %v223
    %v1048 = vunpack.c.l.b16 %v224
    %v1049 = vunpack.c.l.b16 %v225
    %v1050 = vunpack.c.l.b16 %v226
    %v1051 = vunpack.c.l.b16 %v227
    %v1052 = vunpack.c.l.b16 %v228
    %v1053 = vunpack.c.l.b16 %v229
    %v1054 = vunpack.c.l.b16 %v230
    %v1055 = vunpack.c.l.b16 %v231
    %v1056 = vunpack.c.l.b16 %v232
    %v1057 = vunpack.c.l.b16 %v233
    %v1058 = vunpack.c.l.b16 %v234
    %v1059 = vunpack.c.l.b16 %v235
    %v1060 = vunpack.c.l.b16 %v236
    %v1061 = vunpack.c.l.b16 %v237
    %v1062 = vunpack.c.l.b16 %v238
    %v1063 = vunpack.c.l.b16 %v239
    %v1064 = vunpack.c.l.b16 %v240
    %v1065 = vunpack.c.l.b16 %v241
    %v1066 = vunpack.c.l.b16 %v242
    %v1067 = vunpack.c.l.b16 %v243
    %v1068 = vunpack.c.l.b16 %v244
    %v1069 = vunpack.c.l.b16 %v245
    %v1070 = vunpack.c.l.b16 %v246
    %v1071 = vunpack.c.l.b16 %v247
    %v1072 = vunpack.c.l.b16 %v248
    %v1073 = vunpack.c.l.b16 %v249
    %v1074 = vunpack.c.l.b16 %v250
    %v1075 = vunpack.c.l.b16 %v251
    %v1076 = vunpack.c.l.b16 %v252
    %v1077 = vunpack.c.l.b16 %v253
    %v1078 = vunpack.c.l.b16 %v254
    %v1079 = vunpack.c.l.b16 %v255
    %v1080 = vunpack.c.l.b16 %v256
    %v1081 = vunpack.c.l.b16 %v257
    %v1082 = vunpack.c.l.b16 %v258
    %v1083 = vunpack.c.l.b16 %v259
    %v1084 = vunpack.c.l.b16 %v260
    %v1085 = vunpack.c.l.b16 %v261
    %v1086 = vunpack.c.l.b16 %v262
    %v1087 = vunpack.c.l.b16 %v263
    %v1088 = vunpack.c.l.b16 %v264
    %v1089 = vunpack.c.l.b16 %v265
    %v1090 = vunpack.c.l.b16 %v266
    %v1091 = vunpack.c.l.b16 %v267
    %v1092 = vunpack.c.l.b16 %v268
    %v1093 = vunpack.c.l.b16 %v269
    %v1094 = vunpack.c.l.b16 %v270
    %v1095 = vunpack.c.l.b16 %v271
    %v1096 = vunpack.c.l.b16 %v272
    %v1097 = vunpack.c.l.b16 %v273
    %v1098 = vunpack.c.l.b16 %v274
    %v1099 = vunpack.c.l.b16 %v275
    %v1100 = vunpack.c.l.b16 %v276
    %v1101 = vunpack.c.l.b16 %v277
    %v1102 = vunpack.c.l.b16 %v278
    %v1103 = vunpack.c.l.b16 %v279
    %v1104 = vunpack.c.l.b16 %v280
    %v1105 = vunpack.c.l.b16 %v281
    %v1106 = vunpack.c.l.b16 %v282
    %v1107 = vunpack.c.l.b16 %v283
    %v1108 = vunpack.c.l.b16 %v284
    %v1109 = vunpack.c.l.b16 %v285
    %v1110 = vunpack.c.l.b16 %v286
    %v1111 = vunpack.c.l.b16 %v287
    %v1112 = vunpack.c.l.b16 %v288
    %v1113 = vunpack.c.l.b16 %v289
    %v1114 = vunpack.c.l.b16 %v290
    %v1115 = vunpack.c.l.b16 %v291
    %v1116 = vunpack.c.l.b16 %v292
    %v1117 = vunpack.c.l.b16 %v293
    %v1118 = vunpack.c.l.b16 %v294
    %v1119 = vunpack.c.l.b16 %v295
    %v1120 = vunpack.c.l.b16 %v296
    %v1121 = vunpack.c.l.b16 %v297
    %v1122 = vunpack.c.l.b16 %v298
    %v1123 = vunpack.c.l.b16 %v299
    %v1124 = vunpack.c.l.b16 %v300
    %v1125 = vunpack.c.l.b16 %v301
    %v1126 = vunpack.c.l.b16 %v302
    %v1127 = vunpack.c.l.b16 %v303
    %v1128 = vunpack.c.l.b16 %v304
    %v1129 = vunpack.c.l.b16 %v305
    %v1130 = vunpack.c.l.b16 %v306
    %v1131 = vunpack.c.l.b16 %v307
    %v1132 = vunpack.c.l.b16 %v308
    %v1133 = vunpack.c.l.b16 %v309
    %v1134 = vunpack.c.l.b16 %v310
    %v1135 = vunpack.c.l.b16 %v311
    %v1136 = vunpack.c.l.b16 %v312
    %v1137 = vunpack.c.l.b16 %v313
    %v1138 = vunpack.c.l.b16 %v314
    %v1139 = vunpack.c.l.b16 %v315
    %v1140 = vunpack.c.l.b16 %v316
    %v1141 = vunpack.c.l.b16 %v317
    %v1142 = vunpack.c.l.b16 %v318
    %v1143 = vunpack.c.l.b16 %v319
    %v1144 = vunpack.c.l.b16 %v320
    %v1145 = vunpack.c.l.b16 %v321
    %v1146 = vunpack.c.l.b16 %v322
    %v1147 = vunpack.c.l.b16 %v323
    %v1148 = vunpack.c.l.b16 %v324
    %v1149 = vunpack.c.l.b16 %v325
    %v1150 = vunpack.c.l.b16 %v326
    %v1151 = vunpack.c.l.b16 %v327
    %v1152 = vunpack.c.l.b16 %v328
    %v1153 = vunpack.c.l.b16 %v329
    %v1154 = vunpack.c.l.b16 %v330
    %v1155 = vunpack.c.l.b16 %v331
    %v1156 = vunpack.c.l.b16 %v332
    %v1157 = vunpack.c.l.b16 %v333
    %v1158 = vunpack.c.l.b16 %v334
    %v1159 = vunpack.c.l.b16 %v335
    %v1160 = vunpack.c.l.b16 %v336
    %v1161 = vunpack.c.l.b16 %v337
    %v1162 = vunpack.c.l.b16 %v338
    %v1163 = vunpack.c.l.b16 %v339
    %v1164 = vunpack.c.l.b16 %v340
    %v1165 = vunpack.c.l.b16 %v341
    %v1166 = vunpack.c.l.b16 %v342
    %v1167 = vunpack.c.l.b16 %v343
    %v1168 = vunpack.c.l.b16 %v344
    %v1169 = vunpack.c.l.b16 %v345
    %v1170 = vunpack.c.l.b16 %v346
    %v1171 = vunpack.c.l.b16 %v347
    %v1172 = vunpack.c.l.b16 %v348
    %v1173 = vunpack.c.l.b16 %v349
    %v1174 = vunpack.c.l.b16 %v350
    %v1175 = vunpack.c.l.b16 %v351
    %v1176 = vunpack.c.l.b16 %v352
    %v1177 = vunpack.c.l.b16 %v353
    %v1178 = vunpack.c.l.b16 %v354
    %v1179 = vunpack.c.l.b16 %v355
    %v1180 = vunpack.c.l.b16 %v356
    %v1181 = vunpack.c.l.b16 %v357
    %v1182 = vunpack.c.l.b16 %v358
    %v1183 = vunpack.c.l.b16 %v359
    %v1184 = vunpack.c.l.b16 %v360
    %v1185 = vunpack.c.l.b16 %v361
    %v1186 = vunpack.c.l.b16 %v362
    %v1187 = vunpack.c.l.b16 %v363
    %v1188 = vunpack.c.l.b16 %v364
    %v1189 = vunpack.c.l.b16 %v365
    %v1190 = vunpack.c.l.b16 %v366
    %v1191 = vunpack.c.l.b16 %v367
    %v1192 = vunpack.c.l.b16 %v368
    %v1193 = vunpack.c.l.b16 %v369
    %v1194 = vunpack.c.l.b16 %v370
    %v1195 = vunpack.c.l.b16 %v371
    %v1196 = vunpack.c.l.b16 %v372
    %v1197 = vunpack.c.l.b16 %v373
    %v1198 = vunpack.c.l.b16 %v374
    %v1199 = vunpack.c.l.b16 %v375
    %v1200 = vunpack.c.l.b16 %v376
    %v1201 = vunpack.c.l.b16 %v377
    %v1202 = vunpack.c.l.b16 %v378
    %v1203 = vunpack.c.l.b16 %v379
    %v1204 = vunpack.c.l.b16 %v380
    %v1205 = vunpack.c.l.b16 %v381
    %v1206 = vunpack.c.l.b16 %v382
    %v1207 = vunpack.c.l.b16 %v383
    %v1208 = vunpack.c.l.b16 %v384
    %v1209 = vunpack.c.l.b16 %v385
    %v1210 = vunpack.c.l.b16 %v386
    %v1211 = vunpack.c.l.b16 %v387
    %v1212 = vunpack.c.l.b16 %v388
    %v1213 = vunpack.c.l.b16 %v389
    %v1214 = vunpack.c.l.b16 %v390
    %v1215 = vunpack.c.l.b16 %v391
    %v1216 = vunpack.c.l.b16 %v392
    %v1217 = vunpack.c.l.b16 %v393
    %v1218 = vunpack.c.l.b16 %v394
    %v1219 = vunpack.c.l.b16 %v395
    %v1220 = vunpack.c.l.b16 %v396
    %v1221 = vunpack.c.l.b16 %v397
    %v1222 = vunpack.c.l.b16 %v398
    %v1223 = vunpack.c.l.b16 %v399
    %v1224 = vunpack.c.l.b16 %v400
    %v1225 = vunpack.c.l.b16 %v401
    %v1226 = vunpack.c.l.b16 %v402
    %v1227 = vunpack.c.l.b16 %v403
    %v1228 = vunpack.c.l.b16 %v404
    %v1229 = vunpack.c.l.b16 %v405
    %v1230 = vunpack.c.l.b16 %v406
    %v1231 = vunpack.c.l.b16 %v407
    %v1232 = vunpack.c.l.b16 %v408
    %v1233 = vunpack.c.l.b16 %v409
    %v1234 = vunpack.c.l.b16 %v410
    %v1235 = vunpack.c.l.b16 %v411
    %v1236 = vunpack.c.l.b16 %v412
    %v1237 = vunpack.c.l.b16 %v413
    %v1238 = vunpack.c.l.b16 %v414
    %v1239 = vunpack.c.l.b16 %v415
    %v1240 = vunpack.c.l.b16 %v416
    %v1241 = vunpack.c.l.b16 %v417
    %v1242 = vunpack.c.l.b16 %v418
    %v1243 = vunpack.c.l.b16 %v419
    %v1244 = vunpack.c.l.b16 %v420
    %v1245 = vunpack.c.l.b16 %v421
    %v1246 = vunpack.c.l.b16 %v422
    %v1247 = vunpack.c.l.b16 %v423
    %v1248 = vunpack.c.l.b16 %v424
    %v1249 = vunpack.c.l.b16 %v425
    %v1250 = vunpack.c.l.b16 %v426
    %v1251 = vunpack.c.l.b16 %v427
    %v1252 = vunpack.c.l.b16 %v428
    %v1253 = vunpack.c.l.b16 %v429
    %v1254 = vunpack.c.l.b16 %v430
    %v1255 = vunpack.c.l.b16 %v431
    %v1256 = vunpack.c.l.b16 %v432
    %v1257 = vunpack.c.l.b16 %v433
    %v1258 = vunpack.c.l.b16 %v434
    %v1259 = vunpack.c.l.b16 %v435
    %v1260 = vunpack.c.l.b16 %v436
    %v1261 = vunpack.c.l.b16 %v437
    %v1262 = vunpack.c.l.b16 %v438
    %v1263 = vunpack.c.l.b16 %v439
    %v1264 = vunpack.c.l.b16 %v440
    %v1265 = vunpack.c.l.b16 %v441
    %v1266 = vunpack.c.l.b16 %v442
    %v1267 = vunpack.c.l.b16 %v443
    %v1268 = vunpack.c.l.b16 %v444
    %v1269 = vunpack.c.l.b16 %v445
    %v1270 = vunpack.c.l.b16 %v446
    %v1271 = vunpack.c.l.b16 %v447
    %v1272 = vunpack.c.l.b16 %v448
    %v1273 = vunpack.c.l.b16 %v449
    %v1274 = vunpack.c.l.b16 %v450
    %v1275 = vunpack.c.l.b16 %v451
    %v1276 = vunpack.c.l.b16 %v452
    %v1277 = vunpack.c.l.b16 %v453
    %v1278 = vunpack.c.l.b16 %v454
    %v1279 = vunpack.c.l.b16 %v455
    %v1280 = vunpack.c.l.b16 %v456
    %v1281 = vunpack.c.l.b16 %v457
    %v1282 = vpack.c.b16 %v915, %v914
    %v1283 = vpack.c.b16 %v917, %v916
    %v1284 = vpack.c.b16 %v919, %v918
    %v1285 = vpack.c.b16 %v921, %v920
    %v1286 = vpack.c.b16 %v923, %v922
    %v1287 = vpack.c.b16 %v925, %v924
    %v1288 = vpack.c.b16 %v927, %v926
    %v1289 = vpack.c.b16 %v929, %v928
    %v1290 = vpack.c.b16 %v931, %v930
    %v1291 = vpack.c.b16 %v933, %v932
    %v1292 = vpack.c.b16 %v935, %v934
    %v1293 = vpack.c.b16 %v937, %v936
    %v1294 = vpack.c.b16 %v939, %v938
    %v1295 = vpack.c.b16 %v941, %v940
    %v1296 = vpack.c.b16 %v943, %v942
    %v1297 = vpack.c.b16 %v945, %v944
    %v1298 = vpack.c.b16 %v947, %v946
    %v1299 = vpack.c.b16 %v949, %v948
    %v1300 = vpack.c.b16 %v951, %v950
    %v1301 = vpack.c.b16 %v953, %v952
    %v1302 = vpack.c.b16 %v955, %v954
    %v1303 = vpack.c.b16 %v957, %v956
    %v1304 = vpack.c.b16 %v959, %v958
    %v1305 = vpack.c.b16 %v961, %v960
    %v1306 = vpack.c.b16 %v963, %v962
    %v1307 = vpack.c.b16 %v965, %v964
    %v1308 = vpack.c.b16 %v967, %v966
    %v1309 = vpack.c.b16 %v969, %v968
    %v1310 = vpack.c.b16 %v971, %v970
    %v1311 = vpack.c.b16 %v973, %v972
    %v1312 = vpack.c.b16 %v975, %v974
    %v1313 = vpack.c.b16 %v977, %v976
    %v1314 = vpack.c.b16 %v979, %v978
    %v1315 = vpack.c.b16 %v981, %v980
    %v1316 = vpack.c.b16 %v983, %v982
    %v1317 = vpack.c.b16 %v985, %v984
    %v1318 = vpack.c.b16 %v987, %v986
    %v1319 = vpack.c.b16 %v989, %v988
    %v1320 = vpack.c.b16 %v991, %v990
    %v1321 = vpack.c.b16 %v993, %v992
    %v1322 = vpack.c.b16 %v995, %v994
    %v1323 = vpack.c.b16 %v997, %v996
    %v1324 = vpack.c.b16 %v999, %v998
    %v1325 = vpack.c.b16 %v1001, %v1000
    %v1326 = vpack.c.b16 %v1003, %v1002
    %v1327 = vpack.c.b16 %v1005, %v1004
    %v1328 = vpack.c.b16 %v1007, %v1006
    %v1329 = vpack.c.b16 %v1009, %v1008
    %v1330 = vpack.c.b16 %v1011, %v1010
    %v1331 = vpack.c.b16 %v1013, %v1012
    %v1332 = vpack.c.b16 %v1015, %v1014
    %v1333 = vpack.c.b16 %v1017, %v1016
    %v1334 = vpack.c.b16 %v1019, %v1018
    %v1335 = vpack.c.b16 %v1021, %v1020
    %v1336 = vpack.c.b16 %v1023, %v1022
    %v1337 = vpack.c.b16 %v1025, %v1024
    %v1338 = vpack.c.b16 %v1027, %v1026
    %v1339 = vpack.c.b16 %v1029, %v1028
    %v1340 = vpack.c.b16 %v1031, %v1030
    %v1341 = vpack.c.b16 %v1033, %v1032
    %v1342 = vpack.c.b16 %v1035, %v1034
    %v1343 = vpack.c.b16 %v1037, %v1036
    %v1344 = vpack.c.b16 %v1039, %v1038
    %v1345 = vpack.c.b16 %v1041, %v1040
    %v1346 = vpack.c.b16 %v1043, %v1042
    %v1347 = vpack.c.b16 %v1045, %v1044
    %v1348 = vpack.c.b16 %v1047, %v1046
    %v1349 = vpack.c.b16 %v1049, %v1048
    %v1350 = vpack.c.b16 %v1051, %v1050
    %v1351 = vpack.c.b16 %v1053, %v1052
    %v1352 = vpack.c.b16 %v1055, %v1054
    %v1353 = vpack.c.b16 %v1057, %v1056
    %v1354 = vpack.c.b16 %v1059, %v1058
    %v1355 = vpack.c.b16 %v1061, %v1060
    %v1356 = vpack.c.b16 %v1063, %v1062
    %v1357 = vpack.c.b16 %v1065, %v1064
    %v1358 = vpack.c.b16 %v1067, %v1066
    %v1359 = vpack.c.b16 %v1069, %v1068
    %v1360 = vpack.c.b16 %v1071, %v1070
    %v1361 = vpack.c.b16 %v1073, %v1072
    %v1362 = vpack.c.b16 %v1075, %v1074
    %v1363 = vpack.c.b16 %v1077, %v1076
    %v1364 = vpack.c.b16 %v1079, %v1078
    %v1365 = vpack.c.b16 %v1081, %v1080
    %v1366 = vpack.c.b16 %v1083, %v1082
    %v1367 = vpack.c.b16 %v1085, %v1084
    %v1368 = vpack.c.b16 %v1087, %v1086
    %v1369 = vpack.c.b16 %v1089, %v1088
    %v1370 = vpack.c.b16 %v1091, %v1090
    %v1371 = vpack.c.b16 %v1093, %v1092
    %v1372 = vpack.c.b16 %v1095, %v1094
    %v1373 = vpack.c.b16 %v1097, %v1096
    %v1374 = vpack.c.b16 %v1099, %v1098
    %v1375 = vpack.c.b16 %v1101, %v1100
    %v1376 = vpack.c.b16 %v1103, %v1102
    %v1377 = vpack.c.b16 %v1105, %v1104
    %v1378 = vpack.c.b16 %v1107, %v1106
    %v1379 = vpack.c.b16 %v1109, %v1108
    %v1380 = vpack.c.b16 %v1111, %v1110
    %v1381 = vpack.c.b16 %v1113, %v1112
    %v1382 = vpack.c.b16 %v1115, %v1114
    %v1383 = vpack.c.b16 %v1117, %v1116
    %v1384 = vpack.c.b16 %v1119, %v1118
    %v1385 = vpack.c.b16 %v1121, %v1120
    %v1386 = vpack.c.b16 %v1123, %v1122
    %v1387 = vpack.c.b16 %v1125, %v1124
    %v1388 = vpack.c.b16 %v1127, %v1126
    %v1389 = vpack.c.b16 %v1129, %v1128
    %v1390 = vpack.c.b16 %v1131, %v1130
    %v1391 = vpack.c.b16 %v1133, %v1132
    %v1392 = vpack.c.b16 %v1135, %v1134
    %v1393 = vpack.c.b16 %v1137, %v1136
    %v1394 = vpack.c.b16 %v1139, %v1138
    %v1395 = vpack.c.b16 %v1141, %v1140
    %v1396 = vpack.c.b16 %v1143, %v1142
    %v1397 = vpack.c.b16 %v1145, %v1144
    %v1398 = vpack.c.b16 %v1147, %v1146
    %v1399 = vpack.c.b16 %v1149, %v1148
    %v1400 = vpack.c.b16 %v1151, %v1150
    %v1401 = vpack.c.b16 %v1153, %v1152
    %v1402 = vpack.c.b16 %v1155, %v1154
    %v1403 = vpack.c.b16 %v1157, %v1156
    %v1404 = vpack.c.b16 %v1159, %v1158
    %v1405 = vpack.c.b16 %v1161, %v1160
    %v1406 = vpack.c.b16 %v1163, %v1162
    %v1407 = vpack.c.b16 %v1165, %v1164
    %v1408 = vpack.c.b16 %v1167, %v1166
    %v1409 = vpack.c.b16 %v1169, %v1168
    %v1410 = vpack.c.b16 %v1171, %v1170
    %v1411 = vpack.c.b16 %v1173, %v1172
    %v1412 = vpack.c.b16 %v1175, %v1174
    %v1413 = vpack.c.b16 %v1177, %v1176
    %v1414 = vpack.c.b16 %v1179, %v1178
    %v1415 = vpack.c.b16 %v1181, %v1180
    %v1416 = vpack.c.b16 %v1183, %v1182
    %v1417 = vpack.c.b16 %v1185, %v1184
    %v1418 = vpack.c.b16 %v1187, %v1186
    %v1419 = vpack.c.b16 %v1189, %v1188
    %v1420 = vpack.c.b16 %v1191, %v1190
    %v1421 = vpack.c.b16 %v1193, %v1192
    %v1422 = vpack.c.b16 %v1195, %v1194
    %v1423 = vpack.c.b16 %v1197, %v1196
    %v1424 = vpack.c.b16 %v1199, %v1198
    %v1425 = vpack.c.b16 %v1201, %v1200
    %v1426 = vpack.c.b16 %v1203, %v1202
    %v1427 = vpack.c.b16 %v1205, %v1204
    %v1428 = vpack.c.b16 %v1207, %v1206
    %v1429 = vpack.c.b16 %v1209, %v1208
    %v1430 = vpack.c.b16 %v1211, %v1210
    %v1431 = vpack.c.b16 %v1213, %v1212
    %v1432 = vpack.c.b16 %v1215, %v1214
    %v1433 = vpack.c.b16 %v1217, %v1216
    %v1434 = vpack.c.b16 %v1219, %v1218
    %v1435 = vpack.c.b16 %v1221, %v1220
    %v1436 = vpack.c.b16 %v1223, %v1222
    %v1437 = vpack.c.b16 %v1225, %v1224
    %v1438 = vpack.c.b16 %v1227, %v1226
    %v1439 = vpack.c.b16 %v1229, %v1228
    %v1440 = vpack.c.b16 %v1231, %v1230
    %v1441 = vpack.c.b16 %v1233, %v1232
    %v1442 = vpack.c.b16 %v1235, %v1234
    %v1443 = vpack.c.b16 %v1237, %v1236
    %v1444 = vpack.c.b16 %v1239, %v1238
    %v1445 = vpack.c.b16 %v1241, %v1240
    %v1446 = vpack.c.b16 %v1243, %v1242
    %v1447 = vpack.c.b16 %v1245, %v1244
    %v1448 = vpack.c.b16 %v1247, %v1246
    %v1449 = vpack.c.b16 %v1249, %v1248
    %v1450 = vpack.c.b16 %v1251, %v1250
    %v1451 = vpack.c.b16 %v1253, %v1252
    %v1452 = vpack.c.b16 %v1255, %v1254
    %v1453 = vpack.c.b16 %v1257, %v1256
    %v1454 = vpack.c.b16 %v1259, %v1258
    %v1455 = vpack.c.b16 %v1261, %v1260
    %v1456 = vpack.c.b16 %v1263, %v1262
    %v1457 = vpack.c.b16 %v1265, %v1264
    %v1458 = vpack.c.b16 %v1267, %v1266
    %v1459 = vpack.c.b16 %v1269, %v1268
    %v1460 = vpack.c.b16 %v1271, %v1270
    %v1461 = vpack.c.b16 %v1273, %v1272
    %v1462 = vpack.c.b16 %v1275, %v1274
    %v1463 = vpack.c.b16 %v1277, %v1276
    %v1464 = vpack.c.b16 %v1279, %v1278
    %v1465 = vpack.c.b16 %v1281, %v1280
    %1650 = vmatprep.subr.bf16.mxu0 0
    %1651 = vmatpush1.bf16.msra.mxu0 %v1289
    %1652 = vmatprep.subr.bf16.mxu0 0
    %1653 = vmatpush1.bf16.msra.mxu0 %v1288
    %1654 = vmatprep.subr.bf16.mxu0 0
    %1655 = vmatpush1.bf16.msra.mxu0 %v1287
    %1656 = vmatprep.subr.bf16.mxu0 0
    %1657 = vmatpush1.bf16.msra.mxu0 %v1286
    %1658 = vmatprep.subr.bf16.mxu0 0
    %1659 = vmatpush1.bf16.msra.mxu0 %v1285
    %1660 = vmatprep.subr.bf16.mxu0 0
    %1661 = vmatpush1.bf16.msra.mxu0 %v1284
    %1662 = vmatprep.subr.bf16.mxu0 0
    %1663 = vmatpush1.bf16.msra.mxu0 %v1283
    %1664 = vmatprep.subr.bf16.mxu0 0
    %1665 = vmatpush1.bf16.msra.mxu0 %v1282
    %1666 = vmatprep.subr.bf16.mxu0 0
    %1667 = vmatpush2.bf16.msra.mxu0 %v1297
    %1668 = vmatprep.subr.bf16.mxu0 0
    %1669 = vmatpush2.bf16.msra.mxu0 %v1296
    %1670 = vmatprep.subr.bf16.mxu0 0
    %1671 = vmatpush2.bf16.msra.mxu0 %v1295
    %1672 = vmatprep.subr.bf16.mxu0 0
    %1673 = vmatpush2.bf16.msra.mxu0 %v1294
    %1674 = vmatprep.subr.bf16.mxu0 0
    %1675 = vmatpush2.bf16.msra.mxu0 %v1293
    %1676 = vmatprep.subr.bf16.mxu0 0
    %1677 = vmatpush2.bf16.msra.mxu0 %v1292
    %1678 = vmatprep.subr.bf16.mxu0 0
    %1679 = vmatpush2.bf16.msra.mxu0 %v1291
    %1680 = vmatprep.subr.bf16.mxu0 0
    %1681 = vmatpush2.bf16.msra.mxu0 %v1290
    %1682 = vmatprep.mubr.bf16.mxu0 %v501
    %1683 = vmatmul.mubr.bf16.gmra.mxu0 %v500
    %v1684 = vpop.f32.mrf.mxu0
    %v1685 = vadd.f32 %v463, %v1684
    %v1686 = vpop.f32.mrf.mxu0
    %v1687 = vpop.f32.mrf.mxu0
    %v1688 = vpop.f32.mrf.mxu0
    %1689 = vdwg.mxu0
    %1690 = vmatprep.subr.bf16.mxu0 0
    %1691 = vmatpush1.bf16.msra.mxu0 %v1305
    %1692 = vmatprep.subr.bf16.mxu0 0
    %1693 = vmatpush1.bf16.msra.mxu0 %v1304
    %1694 = vmatprep.subr.bf16.mxu0 0
    %1695 = vmatpush1.bf16.msra.mxu0 %v1303
    %1696 = vmatprep.subr.bf16.mxu0 0
    %1697 = vmatpush1.bf16.msra.mxu0 %v1302
    %1698 = vmatprep.subr.bf16.mxu0 0
    %1699 = vmatpush1.bf16.msra.mxu0 %v1301
    %1700 = vmatprep.subr.bf16.mxu0 0
    %1701 = vmatpush1.bf16.msra.mxu0 %v1300
    %1702 = vmatprep.subr.bf16.mxu0 0
    %1703 = vmatpush1.bf16.msra.mxu0 %v1299
    %1704 = vmatprep.subr.bf16.mxu0 0
    %1705 = vmatpush1.bf16.msra.mxu0 %v1298
    %1706 = vmatprep.subr.bf16.mxu0 0
    %1707 = vmatpush2.bf16.msra.mxu0 %v1313
    %1708 = vmatprep.subr.bf16.mxu0 0
    %1709 = vmatpush2.bf16.msra.mxu0 %v1312
    %1710 = vmatprep.subr.bf16.mxu0 0
    %1711 = vmatpush2.bf16.msra.mxu0 %v1311
    %1712 = vmatprep.subr.bf16.mxu0 0
    %1713 = vmatpush2.bf16.msra.mxu0 %v1310
    %1714 = vmatprep.subr.bf16.mxu0 0
    %1715 = vmatpush2.bf16.msra.mxu0 %v1309
    %1716 = vmatprep.subr.bf16.mxu0 0
    %1717 = vmatpush2.bf16.msra.mxu0 %v1308
    %1718 = vmatprep.subr.bf16.mxu0 0
    %1719 = vmatpush2.bf16.msra.mxu0 %v1307
    %1720 = vmatprep.subr.bf16.mxu0 0
    %1721 = vmatpush2.bf16.msra.mxu0 %v1306
    %1722 = vmatprep.mubr.bf16.mxu0 %v503
    %1723 = vmatmul.mubr.bf16.gmra.mxu0 %v502
    %v1724 = vpop.f32.mrf.mxu0
    %v1725 = vadd.f32 %v1685, %v1724
    %v1726 = vpop.f32.mrf.mxu0
    %v1727 = vpop.f32.mrf.mxu0
    %v1728 = vpop.f32.mrf.mxu0
    %1729 = vdwg.mxu0
    %1730 = vmatprep.subr.bf16.mxu0 0
    %1731 = vmatpush1.bf16.msra.mxu0 %v1321
    %1732 = vmatprep.subr.bf16.mxu0 0
    %1733 = vmatpush1.bf16.msra.mxu0 %v1320
    %1734 = vmatprep.subr.bf16.mxu0 0
    %1735 = vmatpush1.bf16.msra.mxu0 %v1319
    %1736 = vmatprep.subr.bf16.mxu0 0
    %1737 = vmatpush1.bf16.msra.mxu0 %v1318
    %1738 = vmatprep.subr.bf16.mxu0 0
    %1739 = vmatpush1.bf16.msra.mxu0 %v1317
    %1740 = vmatprep.subr.bf16.mxu0 0
    %1741 = vmatpush1.bf16.msra.mxu0 %v1316
    %1742 = vmatprep.subr.bf16.mxu0 0
    %1743 = vmatpush1.bf16.msra.mxu0 %v1315
    %1744 = vmatprep.subr.bf16.mxu0 0
    %1745 = vmatpush1.bf16.msra.mxu0 %v1314
    %1746 = vmatprep.subr.bf16.mxu0 0
    %1747 = vmatpush2.bf16.msra.mxu0 %v1329
    %1748 = vmatprep.subr.bf16.mxu0 0
    %1749 = vmatpush2.bf16.msra.mxu0 %v1328
    %1750 = vmatprep.subr.bf16.mxu0 0
    %1751 = vmatpush2.bf16.msra.mxu0 %v1327
    %1752 = vmatprep.subr.bf16.mxu0 0
    %1753 = vmatpush2.bf16.msra.mxu0 %v1326
    %1754 = vmatprep.subr.bf16.mxu0 0
    %1755 = vmatpush2.bf16.msra.mxu0 %v1325
    %1756 = vmatprep.subr.bf16.mxu0 0
    %1757 = vmatpush2.bf16.msra.mxu0 %v1324
    %1758 = vmatprep.subr.bf16.mxu0 0
    %1759 = vmatpush2.bf16.msra.mxu0 %v1323
    %1760 = vmatprep.subr.bf16.mxu0 0
    %1761 = vmatpush2.bf16.msra.mxu0 %v1322
    %1762 = vmatprep.mubr.bf16.mxu0 %v505
    %1763 = vmatmul.mubr.bf16.gmra.mxu0 %v504
    %v1764 = vpop.f32.mrf.mxu0
    %v1765 = vadd.f32 %v1725, %v1764
    %v1766 = vpop.f32.mrf.mxu0
    %v1767 = vpop.f32.mrf.mxu0
    %v1768 = vpop.f32.mrf.mxu0
    %1769 = vdwg.mxu0
    %1770 = vmatprep.subr.bf16.mxu0 0
    %1771 = vmatpush1.bf16.msra.mxu0 %v1337
    %1772 = vmatprep.subr.bf16.mxu0 0
    %1773 = vmatpush1.bf16.msra.mxu0 %v1336
    %1774 = vmatprep.subr.bf16.mxu0 0
    %1775 = vmatpush1.bf16.msra.mxu0 %v1335
    %1776 = vmatprep.subr.bf16.mxu0 0
    %1777 = vmatpush1.bf16.msra.mxu0 %v1334
    %1778 = vmatprep.subr.bf16.mxu0 0
    %1779 = vmatpush1.bf16.msra.mxu0 %v1333
    %1780 = vmatprep.subr.bf16.mxu0 0
    %1781 = vmatpush1.bf16.msra.mxu0 %v1332
    %1782 = vmatprep.subr.bf16.mxu0 0
    %1783 = vmatpush1.bf16.msra.mxu0 %v1331
    %1784 = vmatprep.subr.bf16.mxu0 0
    %1785 = vmatpush1.bf16.msra.mxu0 %v1330
    %1786 = vmatprep.subr.bf16.mxu0 0
    %1787 = vmatpush2.bf16.msra.mxu0 %v1345
    %1788 = vmatprep.subr.bf16.mxu0 0
    %1789 = vmatpush2.bf16.msra.mxu0 %v1344
    %1790 = vmatprep.subr.bf16.mxu0 0
    %1791 = vmatpush2.bf16.msra.mxu0 %v1343
    %1792 = vmatprep.subr.bf16.mxu0 0
    %1793 = vmatpush2.bf16.msra.mxu0 %v1342
    %1794 = vmatprep.subr.bf16.mxu0 0
    %1795 = vmatpush2.bf16.msra.mxu0 %v1341
    %1796 = vmatprep.subr.bf16.mxu0 0
    %1797 = vmatpush2.bf16.msra.mxu0 %v1340
    %1798 = vmatprep.subr.bf16.mxu0 0
    %1799 = vmatpush2.bf16.msra.mxu0 %v1339
    %1800 = vmatprep.subr.bf16.mxu0 0
    %1801 = vmatpush2.bf16.msra.mxu0 %v1338
    %1802 = vmatprep.mubr.bf16.mxu0 %v507
    %1803 = vmatmul.mubr.bf16.gmra.mxu0 %v506
    %v1804 = vpop.f32.mrf.mxu0
    %v1805 = vadd.f32 %v1765, %v1804
    %v1806 = vpop.f32.mrf.mxu0
    %v1807 = vpop.f32.mrf.mxu0
    %v1808 = vpop.f32.mrf.mxu0
    %1809 = vdwg.mxu0
    %1810 = vmatprep.subr.bf16.mxu0 0
    %1811 = vmatpush1.bf16.msra.mxu0 %v1353
    %1812 = vmatprep.subr.bf16.mxu0 0
    %1813 = vmatpush1.bf16.msra.mxu0 %v1352
    %1814 = vmatprep.subr.bf16.mxu0 0
    %1815 = vmatpush1.bf16.msra.mxu0 %v1351
    %1816 = vmatprep.subr.bf16.mxu0 0
    %1817 = vmatpush1.bf16.msra.mxu0 %v1350
    %1818 = vmatprep.subr.bf16.mxu0 0
    %1819 = vmatpush1.bf16.msra.mxu0 %v1349
    %1820 = vmatprep.subr.bf16.mxu0 0
    %1821 = vmatpush1.bf16.msra.mxu0 %v1348
    %1822 = vmatprep.subr.bf16.mxu0 0
    %1823 = vmatpush1.bf16.msra.mxu0 %v1347
    %1824 = vmatprep.subr.bf16.mxu0 0
    %1825 = vmatpush1.bf16.msra.mxu0 %v1346
    %1826 = vmatprep.subr.bf16.mxu0 0
    %1827 = vmatpush2.bf16.msra.mxu0 %v1361
    %1828 = vmatprep.subr.bf16.mxu0 0
    %1829 = vmatpush2.bf16.msra.mxu0 %v1360
    %1830 = vmatprep.subr.bf16.mxu0 0
    %1831 = vmatpush2.bf16.msra.mxu0 %v1359
    %1832 = vmatprep.subr.bf16.mxu0 0
    %1833 = vmatpush2.bf16.msra.mxu0 %v1358
    %1834 = vmatprep.subr.bf16.mxu0 0
    %1835 = vmatpush2.bf16.msra.mxu0 %v1357
    %1836 = vmatprep.subr.bf16.mxu0 0
    %1837 = vmatpush2.bf16.msra.mxu0 %v1356
    %1838 = vmatprep.subr.bf16.mxu0 0
    %1839 = vmatpush2.bf16.msra.mxu0 %v1355
    %1840 = vmatprep.subr.bf16.mxu0 0
    %1841 = vmatpush2.bf16.msra.mxu0 %v1354
    %1842 = vmatprep.mubr.bf16.mxu0 %v509
    %1843 = vmatmul.mubr.bf16.gmra.mxu0 %v508
    %v1844 = vpop.f32.mrf.mxu0
    %v1845 = vadd.f32 %v1805, %v1844
    %v1846 = vpop.f32.mrf.mxu0
    %v1847 = vpop.f32.mrf.mxu0
    %v1848 = vpop.f32.mrf.mxu0
    %1849 = vdwg.mxu0
    %1850 = vmatprep.subr.bf16.mxu0 0
    %1851 = vmatpush1.bf16.msra.mxu0 %v1369
    %1852 = vmatprep.subr.bf16.mxu0 0
    %1853 = vmatpush1.bf16.msra.mxu0 %v1368
    %1854 = vmatprep.subr.bf16.mxu0 0
    %1855 = vmatpush1.bf16.msra.mxu0 %v1367
    %1856 = vmatprep.subr.bf16.mxu0 0
    %1857 = vmatpush1.bf16.msra.mxu0 %v1366
    %1858 = vmatprep.subr.bf16.mxu0 0
    %1859 = vmatpush1.bf16.msra.mxu0 %v1365
    %1860 = vmatprep.subr.bf16.mxu0 0
    %1861 = vmatpush1.bf16.msra.mxu0 %v1364
    %1862 = vmatprep.subr.bf16.mxu0 0
    %1863 = vmatpush1.bf16.msra.mxu0 %v1363
    %1864 = vmatprep.subr.bf16.mxu0 0
    %1865 = vmatpush1.bf16.msra.mxu0 %v1362
    %1866 = vmatprep.subr.bf16.mxu0 0
    %1867 = vmatpush2.bf16.msra.mxu0 %v1377
    %1868 = vmatprep.subr.bf16.mxu0 0
    %1869 = vmatpush2.bf16.msra.mxu0 %v1376
    %1870 = vmatprep.subr.bf16.mxu0 0
    %1871 = vmatpush2.bf16.msra.mxu0 %v1375
    %1872 = vmatprep.subr.bf16.mxu0 0
    %1873 = vmatpush2.bf16.msra.mxu0 %v1374
    %1874 = vmatprep.subr.bf16.mxu0 0
    %1875 = vmatpush2.bf16.msra.mxu0 %v1373
    %1876 = vmatprep.subr.bf16.mxu0 0
    %1877 = vmatpush2.bf16.msra.mxu0 %v1372
    %1878 = vmatprep.subr.bf16.mxu0 0
    %1879 = vmatpush2.bf16.msra.mxu0 %v1371
    %1880 = vmatprep.subr.bf16.mxu0 0
    %1881 = vmatpush2.bf16.msra.mxu0 %v1370
    %1882 = vmatprep.mubr.bf16.mxu0 %v511
    %1883 = vmatmul.mubr.bf16.gmra.mxu0 %v510
    %v1884 = vpop.f32.mrf.mxu0
    %v1885 = vadd.f32 %v1845, %v1884
    %v1886 = vpop.f32.mrf.mxu0
    %v1887 = vpop.f32.mrf.mxu0
    %v1888 = vpop.f32.mrf.mxu0
    %1889 = vdwg.mxu0
    %1890 = vmatprep.subr.bf16.mxu0 0
    %1891 = vmatpush1.bf16.msra.mxu0 %v1385
    %1892 = vmatprep.subr.bf16.mxu0 0
    %1893 = vmatpush1.bf16.msra.mxu0 %v1384
    %1894 = vmatprep.subr.bf16.mxu0 0
    %1895 = vmatpush1.bf16.msra.mxu0 %v1383
    %1896 = vmatprep.subr.bf16.mxu0 0
    %1897 = vmatpush1.bf16.msra.mxu0 %v1382
    %1898 = vmatprep.subr.bf16.mxu0 0
    %1899 = vmatpush1.bf16.msra.mxu0 %v1381
    %1900 = vmatprep.subr.bf16.mxu0 0
    %1901 = vmatpush1.bf16.msra.mxu0 %v1380
    %1902 = vmatprep.subr.bf16.mxu0 0
    %1903 = vmatpush1.bf16.msra.mxu0 %v1379
    %1904 = vmatprep.subr.bf16.mxu0 0
    %1905 = vmatpush1.bf16.msra.mxu0 %v1378
    %1906 = vmatprep.subr.bf16.mxu0 0
    %1907 = vmatpush2.bf16.msra.mxu0 %v1393
    %1908 = vmatprep.subr.bf16.mxu0 0
    %1909 = vmatpush2.bf16.msra.mxu0 %v1392
    %1910 = vmatprep.subr.bf16.mxu0 0
    %1911 = vmatpush2.bf16.msra.mxu0 %v1391
    %1912 = vmatprep.subr.bf16.mxu0 0
    %1913 = vmatpush2.bf16.msra.mxu0 %v1390
    %1914 = vmatprep.subr.bf16.mxu0 0
    %1915 = vmatpush2.bf16.msra.mxu0 %v1389
    %1916 = vmatprep.subr.bf16.mxu0 0
    %1917 = vmatpush2.bf16.msra.mxu0 %v1388
    %1918 = vmatprep.subr.bf16.mxu0 0
    %1919 = vmatpush2.bf16.msra.mxu0 %v1387
    %1920 = vmatprep.subr.bf16.mxu0 0
    %1921 = vmatpush2.bf16.msra.mxu0 %v1386
    %1922 = vmatprep.mubr.bf16.mxu0 %v513
    %1923 = vmatmul.mubr.bf16.gmra.mxu0 %v512
    %v1924 = vpop.f32.mrf.mxu0
    %v1925 = vadd.f32 %v1885, %v1924
    %v1926 = vpop.f32.mrf.mxu0
    %v1927 = vpop.f32.mrf.mxu0
    %v1928 = vpop.f32.mrf.mxu0
    %1929 = vdwg.mxu0
    %1930 = vmatprep.subr.bf16.mxu0 0
    %1931 = vmatpush1.bf16.msra.mxu0 %v1401
    %1932 = vmatprep.subr.bf16.mxu0 0
    %1933 = vmatpush1.bf16.msra.mxu0 %v1400
    %1934 = vmatprep.subr.bf16.mxu0 0
    %1935 = vmatpush1.bf16.msra.mxu0 %v1399
    %1936 = vmatprep.subr.bf16.mxu0 0
    %1937 = vmatpush1.bf16.msra.mxu0 %v1398
    %1938 = vmatprep.subr.bf16.mxu0 0
    %1939 = vmatpush1.bf16.msra.mxu0 %v1397
    %1940 = vmatprep.subr.bf16.mxu0 0
    %1941 = vmatpush1.bf16.msra.mxu0 %v1396
    %1942 = vmatprep.subr.bf16.mxu0 0
    %1943 = vmatpush1.bf16.msra.mxu0 %v1395
    %1944 = vmatprep.subr.bf16.mxu0 0
    %1945 = vmatpush1.bf16.msra.mxu0 %v1394
    %1946 = vmatprep.subr.bf16.mxu0 0
    %1947 = vmatpush2.bf16.msra.mxu0 %v1409
    %1948 = vmatprep.subr.bf16.mxu0 0
    %1949 = vmatpush2.bf16.msra.mxu0 %v1408
    %1950 = vmatprep.subr.bf16.mxu0 0
    %1951 = vmatpush2.bf16.msra.mxu0 %v1407
    %1952 = vmatprep.subr.bf16.mxu0 0
    %1953 = vmatpush2.bf16.msra.mxu0 %v1406
    %1954 = vmatprep.subr.bf16.mxu0 0
    %1955 = vmatpush2.bf16.msra.mxu0 %v1405
    %1956 = vmatprep.subr.bf16.mxu0 0
    %1957 = vmatpush2.bf16.msra.mxu0 %v1404
    %1958 = vmatprep.subr.bf16.mxu0 0
    %1959 = vmatpush2.bf16.msra.mxu0 %v1403
    %1960 = vmatprep.subr.bf16.mxu0 0
    %1961 = vmatpush2.bf16.msra.mxu0 %v1402
    %1962 = vmatprep.mubr.bf16.mxu0 %v515
    %1963 = vmatmul.mubr.bf16.gmra.mxu0 %v514
    %v1964 = vpop.f32.mrf.mxu0
    %v1965 = vadd.f32 %v1925, %v1964
    %v1966 = vpop.f32.mrf.mxu0
    %v1967 = vpop.f32.mrf.mxu0
    %v1968 = vpop.f32.mrf.mxu0
    %1969 = vdwg.mxu0
    %1970 = vmatprep.subr.bf16.mxu0 0
    %1971 = vmatpush1.bf16.msra.mxu0 %v1417
    %1972 = vmatprep.subr.bf16.mxu0 0
    %1973 = vmatpush1.bf16.msra.mxu0 %v1416
    %1974 = vmatprep.subr.bf16.mxu0 0
    %1975 = vmatpush1.bf16.msra.mxu0 %v1415
    %1976 = vmatprep.subr.bf16.mxu0 0
    %1977 = vmatpush1.bf16.msra.mxu0 %v1414
    %1978 = vmatprep.subr.bf16.mxu0 0
    %1979 = vmatpush1.bf16.msra.mxu0 %v1413
    %1980 = vmatprep.subr.bf16.mxu0 0
    %1981 = vmatpush1.bf16.msra.mxu0 %v1412
    %1982 = vmatprep.subr.bf16.mxu0 0
    %1983 = vmatpush1.bf16.msra.mxu0 %v1411
    %1984 = vmatprep.subr.bf16.mxu0 0
    %1985 = vmatpush1.bf16.msra.mxu0 %v1410
    %1986 = vmatprep.subr.bf16.mxu0 0
    %1987 = vmatpush2.bf16.msra.mxu0 %v1425
    %1988 = vmatprep.subr.bf16.mxu0 0
    %1989 = vmatpush2.bf16.msra.mxu0 %v1424
    %1990 = vmatprep.subr.bf16.mxu0 0
    %1991 = vmatpush2.bf16.msra.mxu0 %v1423
    %1992 = vmatprep.subr.bf16.mxu0 0
    %1993 = vmatpush2.bf16.msra.mxu0 %v1422
    %1994 = vmatprep.subr.bf16.mxu0 0
    %1995 = vmatpush2.bf16.msra.mxu0 %v1421
    %1996 = vmatprep.subr.bf16.mxu0 0
    %1997 = vmatpush2.bf16.msra.mxu0 %v1420
    %1998 = vmatprep.subr.bf16.mxu0 0
    %1999 = vmatpush2.bf16.msra.mxu0 %v1419
    %2000 = vmatprep.subr.bf16.mxu0 0
    %2001 = vmatpush2.bf16.msra.mxu0 %v1418
    %2002 = vmatprep.mubr.bf16.mxu0 %v517
    %2003 = vmatmul.mubr.bf16.gmra.mxu0 %v516
    %v2004 = vpop.f32.mrf.mxu0
    %v2005 = vadd.f32 %v1965, %v2004
    %v2006 = vpop.f32.mrf.mxu0
    %v2007 = vpop.f32.mrf.mxu0
    %v2008 = vpop.f32.mrf.mxu0
    %2009 = vdwg.mxu0
    %2010 = vmatprep.subr.bf16.mxu0 0
    %2011 = vmatpush1.bf16.msra.mxu0 %v1433
    %2012 = vmatprep.subr.bf16.mxu0 0
    %2013 = vmatpush1.bf16.msra.mxu0 %v1432
    %2014 = vmatprep.subr.bf16.mxu0 0
    %2015 = vmatpush1.bf16.msra.mxu0 %v1431
    %2016 = vmatprep.subr.bf16.mxu0 0
    %2017 = vmatpush1.bf16.msra.mxu0 %v1430
    %2018 = vmatprep.subr.bf16.mxu0 0
    %2019 = vmatpush1.bf16.msra.mxu0 %v1429
    %2020 = vmatprep.subr.bf16.mxu0 0
    %2021 = vmatpush1.bf16.msra.mxu0 %v1428
    %2022 = vmatprep.subr.bf16.mxu0 0
    %2023 = vmatpush1.bf16.msra.mxu0 %v1427
    %2024 = vmatprep.subr.bf16.mxu0 0
    %2025 = vmatpush1.bf16.msra.mxu0 %v1426
    %2026 = vmatprep.subr.bf16.mxu0 0
    %2027 = vmatpush2.bf16.msra.mxu0 %v1441
    %2028 = vmatprep.subr.bf16.mxu0 0
    %2029 = vmatpush2.bf16.msra.mxu0 %v1440
    %2030 = vmatprep.subr.bf16.mxu0 0
    %2031 = vmatpush2.bf16.msra.mxu0 %v1439
    %2032 = vmatprep.subr.bf16.mxu0 0
    %2033 = vmatpush2.bf16.msra.mxu0 %v1438
    %2034 = vmatprep.subr.bf16.mxu0 0
    %2035 = vmatpush2.bf16.msra.mxu0 %v1437
    %2036 = vmatprep.subr.bf16.mxu0 0
    %2037 = vmatpush2.bf16.msra.mxu0 %v1436
    %2038 = vmatprep.subr.bf16.mxu0 0
    %2039 = vmatpush2.bf16.msra.mxu0 %v1435
    %2040 = vmatprep.subr.bf16.mxu0 0
    %2041 = vmatpush2.bf16.msra.mxu0 %v1434
    %2042 = vmatprep.mubr.bf16.mxu0 %v519
    %2043 = vmatmul.mubr.bf16.gmra.mxu0 %v518
    %v2044 = vpop.f32.mrf.mxu0
    %v2045 = vadd.f32 %v2005, %v2044
    %v2046 = vpop.f32.mrf.mxu0
    %v2047 = vpop.f32.mrf.mxu0
    %v2048 = vpop.f32.mrf.mxu0
    %2049 = vdwg.mxu0
    %2050 = vmatprep.subr.bf16.mxu0 0
    %2051 = vmatpush1.bf16.msra.mxu0 %v1449
    %2052 = vmatprep.subr.bf16.mxu0 0
    %2053 = vmatpush1.bf16.msra.mxu0 %v1448
    %2054 = vmatprep.subr.bf16.mxu0 0
    %2055 = vmatpush1.bf16.msra.mxu0 %v1447
    %2056 = vmatprep.subr.bf16.mxu0 0
    %2057 = vmatpush1.bf16.msra.mxu0 %v1446
    %2058 = vmatprep.subr.bf16.mxu0 0
    %2059 = vmatpush1.bf16.msra.mxu0 %v1445
    %2060 = vmatprep.subr.bf16.mxu0 0
    %2061 = vmatpush1.bf16.msra.mxu0 %v1444
    %2062 = vmatprep.subr.bf16.mxu0 0
    %2063 = vmatpush1.bf16.msra.mxu0 %v1443
    %2064 = vmatprep.subr.bf16.mxu0 0
    %2065 = vmatpush1.bf16.msra.mxu0 %v1442
    %2066 = vmatprep.subr.bf16.mxu0 0
    %2067 = vmatpush2.bf16.msra.mxu0 %v1457
    %2068 = vmatprep.subr.bf16.mxu0 0
    %2069 = vmatpush2.bf16.msra.mxu0 %v1456
    %2070 = vmatprep.subr.bf16.mxu0 0
    %2071 = vmatpush2.bf16.msra.mxu0 %v1455
    %2072 = vmatprep.subr.bf16.mxu0 0
    %2073 = vmatpush2.bf16.msra.mxu0 %v1454
    %2074 = vmatprep.subr.bf16.mxu0 0
    %2075 = vmatpush2.bf16.msra.mxu0 %v1453
    %2076 = vmatprep.subr.bf16.mxu0 0
    %2077 = vmatpush2.bf16.msra.mxu0 %v1452
    %2078 = vmatprep.subr.bf16.mxu0 0
    %2079 = vmatpush2.bf16.msra.mxu0 %v1451
    %2080 = vmatprep.subr.bf16.mxu0 0
    %2081 = vmatpush2.bf16.msra.mxu0 %v1450
    %2082 = vmatprep.mubr.bf16.mxu0 %v521
    %2083 = vmatmul.mubr.bf16.gmra.mxu0 %v520
    %v2084 = vpop.f32.mrf.mxu0
    %v2085 = vadd.f32 %v2045, %v2084
    %v2086 = vpop.f32.mrf.mxu0
    %v2087 = vpop.f32.mrf.mxu0
    %v2088 = vpop.f32.mrf.mxu0
    %2089 = vdwg.mxu0
    %2090 = vmatprep.subr.bf16.mxu0 0
    %2091 = vmatpush1.bf16.msra.mxu0 %v1465
    %2092 = vmatprep.subr.bf16.mxu0 0
    %2093 = vmatpush1.bf16.msra.mxu0 %v1464
    %2094 = vmatprep.subr.bf16.mxu0 0
    %2095 = vmatpush1.bf16.msra.mxu0 %v1463
    %2096 = vmatprep.subr.bf16.mxu0 0
    %2097 = vmatpush1.bf16.msra.mxu0 %v1462
    %2098 = vmatprep.subr.bf16.mxu0 0
    %2099 = vmatpush1.bf16.msra.mxu0 %v1461
    %2100 = vmatprep.subr.bf16.mxu0 0
    %2101 = vmatpush1.bf16.msra.mxu0 %v1460
    %2102 = vmatprep.subr.bf16.mxu0 0
    %2103 = vmatpush1.bf16.msra.mxu0 %v1459
    %2104 = vmatprep.subr.bf16.mxu0 0
    %2105 = vmatpush1.bf16.msra.mxu0 %v1458
    %2106 = vmatprep.subr.bf16.mxu0 0
    %2107 = vmatpush2.bf16.msra.mxu0 0
    %2108 = vmatprep.subr.bf16.mxu0 0
    %2109 = vmatpush2.bf16.msra.mxu0 0
    %2110 = vmatprep.subr.bf16.mxu0 0
    %2111 = vmatpush2.bf16.msra.mxu0 0
    %2112 = vmatprep.subr.bf16.mxu0 0
    %2113 = vmatpush2.bf16.msra.mxu0 0
    %2114 = vmatprep.subr.bf16.mxu0 0
    %2115 = vmatpush2.bf16.msra.mxu0 0
    %2116 = vmatprep.subr.bf16.mxu0 0
    %2117 = vmatpush2.bf16.msra.mxu0 0
    %2118 = vmatprep.subr.bf16.mxu0 0
    %2119 = vmatpush2.bf16.msra.mxu0 0
    %2120 = vmatprep.subr.bf16.mxu0 0
    %2121 = vmatpush2.bf16.msra.mxu0 0
    %2122 = vmatprep.mubr.bf16.mxu0 0
    %2123 = vmatmul.mubr.bf16.gmra.mxu0 %v522
    %v2124 = vpop.f32.mrf.mxu0
    %v2125 = vadd.f32 %v2085, %v2124
    %v2126 = vpop.f32.mrf.mxu0
    %v2127 = vpop.f32.mrf.mxu0
    %v2128 = vpop.f32.mrf.mxu0
    %2129 = vdwg.mxu0
    %v2130 = vmax.f32 %v2125, 0.0
    %v2131 = vpack.c.bf16 %v2130, %v2130
    %v2132 = vld [vmem:[#allocation7] sm:$0xf]
    %v2133 = vld [vmem:[#allocation7 + $0x4] sm:$0xf]
    %v2134 = vld [vmem:[#allocation7 + $0x8] sm:$0xf]
    %v2135 = vld [vmem:[#allocation7 + $0xc] sm:$0xf]
    %v2136 = vld [vmem:[#allocation7 + $0x10] sm:$0xf]
    %v2137 = vld [vmem:[#allocation7 + $0x14] sm:$0xf]
    %v2138 = vld [vmem:[#allocation7 + $0x18] sm:$0xf]
    %v2139 = vld [vmem:[#allocation7 + $0x1c] sm:$0xf]
    %v2140 = vld [vmem:[#allocation7 + $0x20] sm:$0xf]
    %v2141 = vld [vmem:[#allocation7 + $0x24] sm:$0xf]
    %v2142 = vld [vmem:[#allocation7 + $0x28] sm:$0xf]
    %v2143 = vld [vmem:[#allocation7 + $0x2c] sm:$0xf]
    %v2144 = vld [vmem:[#allocation7 + $0x30] sm:$0xf]
    %v2145 = vld [vmem:[#allocation7 + $0x34] sm:$0xf]
    %v2146 = vld [vmem:[#allocation7 + $0x38] sm:$0xf]
    %v2147 = vld [vmem:[#allocation7 + $0x3c] sm:$0xf]
    %v2148 = vld [vmem:[%s4] sm:$0x1]
    %v2150 = vlaneseq
    %v2151 = vshrl.u32 %v2150, 7
    %v2152 = vsub.s32 0, %v2151
    %v2153 = vrot.slane %v2148, %v2152
    %v2171 = vunpack.c.l.b16 %v2132
    %v2172 = vunpack.c.l.b16 %v2133
    %v2173 = vunpack.c.l.b16 %v2134
    %v2174 = vunpack.c.l.b16 %v2135
    %v2175 = vunpack.c.l.b16 %v2136
    %v2176 = vunpack.c.l.b16 %v2137
    %v2177 = vunpack.c.l.b16 %v2138
    %v2178 = vunpack.c.l.b16 %v2139
    %v2179 = vunpack.c.l.b16 %v2140
    %v2180 = vunpack.c.l.b16 %v2141
    %v2181 = vunpack.c.l.b16 %v2142
    %v2182 = vunpack.c.l.b16 %v2143
    %v2183 = vunpack.c.l.b16 %v2144
    %v2184 = vunpack.c.l.b16 %v2145
    %v2185 = vunpack.c.l.b16 %v2146
    %v2186 = vunpack.c.l.b16 %v2147
    %v2187 = vpack.c.b16 %v2172, %v2171
    %v2188 = vpack.c.b16 %v2174, %v2173
    %v2189 = vpack.c.b16 %v2176, %v2175
    %v2190 = vpack.c.b16 %v2178, %v2177
    %v2191 = vpack.c.b16 %v2180, %v2179
    %v2192 = vpack.c.b16 %v2182, %v2181
    %v2193 = vpack.c.b16 %v2184, %v2183
    %v2194 = vpack.c.b16 %v2186, %v2185
    %2203 = vmatprep.subr.bf16.mxu0 0
    %2204 = vmatpush1.bf16.msra.mxu0 %v2194
    %2205 = vmatprep.subr.bf16.mxu0 0
    %2206 = vmatpush1.bf16.msra.mxu0 %v2193
    %2207 = vmatprep.subr.bf16.mxu0 0
    %2208 = vmatpush1.bf16.msra.mxu0 %v2192
    %2209 = vmatprep.subr.bf16.mxu0 0
    %2210 = vmatpush1.bf16.msra.mxu0 %v2191
    %2211 = vmatprep.subr.bf16.mxu0 0
    %2212 = vmatpush1.bf16.msra.mxu0 %v2190
    %2213 = vmatprep.subr.bf16.mxu0 0
    %2214 = vmatpush1.bf16.msra.mxu0 %v2189
    %2215 = vmatprep.subr.bf16.mxu0 0
    %2216 = vmatpush1.bf16.msra.mxu0 %v2188
    %2217 = vmatprep.subr.bf16.mxu0 0
    %2218 = vmatpush1.bf16.msra.mxu0 %v2187
    %2219 = vmatprep.subr.bf16.mxu0 0
    %2220 = vmatpush2.bf16.msra.mxu0 0
    %2221 = vmatprep.subr.bf16.mxu0 0
    %2222 = vmatpush2.bf16.msra.mxu0 0
    %2223 = vmatprep.subr.bf16.mxu0 0
    %2224 = vmatpush2.bf16.msra.mxu0 0
    %2225 = vmatprep.subr.bf16.mxu0 0
    %2226 = vmatpush2.bf16.msra.mxu0 0
    %2227 = vmatprep.subr.bf16.mxu0 0
    %2228 = vmatpush2.bf16.msra.mxu0 0
    %2229 = vmatprep.subr.bf16.mxu0 0
    %2230 = vmatpush2.bf16.msra.mxu0 0
    %2231 = vmatprep.subr.bf16.mxu0 0
    %2232 = vmatpush2.bf16.msra.mxu0 0
    %2233 = vmatprep.subr.bf16.mxu0 0
    %2234 = vmatpush2.bf16.msra.mxu0 0
    %2235 = vmatprep.mubr.bf16.mxu0 0
    %2236 = vmatmul.mubr.bf16.gmra.mxu0 %v2131
    %v2237 = vpop.f32.mrf.mxu0
    %v2238 = vadd.f32 %v2153, %v2237
    %v2239 = vpop.f32.mrf.mxu0
    %v2240 = vpop.f32.mrf.mxu0
    %v2241 = vpop.f32.mrf.mxu0
    %2242 = vdwg.mxu0
    %v2243 = vmax.f32 %v2238, 0.0
    %v2244 = vpack.c.bf16 %v2243, %v2243
    %v2245 = vld [vmem:[#allocation8] sm:$0xf]
    %v2246 = vld [vmem:[#allocation8 + $0x4] sm:$0xf]
    %v2247 = vld [vmem:[#allocation8 + $0x8] sm:$0xf]
    %v2248 = vld [vmem:[#allocation8 + $0xc] sm:$0xf]
    %v2249 = vld [vmem:[#allocation8 + $0x10] sm:$0xf]
    %v2250 = vld [vmem:[#allocation8 + $0x14] sm:$0xf]
    %v2251 = vld [vmem:[#allocation8 + $0x18] sm:$0xf]
    %v2252 = vld [vmem:[#allocation8 + $0x1c] sm:$0xf]
    %v2253 = vld [vmem:[#allocation8 + $0x20] sm:$0xf]
    %v2254 = vld [vmem:[#allocation8 + $0x24] sm:$0xf]
    %v2255 = vld [vmem:[#allocation8 + $0x28] sm:$0xf]
    %v2256 = vld [vmem:[#allocation8 + $0x2c] sm:$0xf]
    %v2257 = vld [vmem:[#allocation8 + $0x30] sm:$0xf]
    %v2258 = vld [vmem:[#allocation8 + $0x34] sm:$0xf]
    %v2259 = vld [vmem:[#allocation8 + $0x38] sm:$0xf]
    %v2260 = vld [vmem:[#allocation8 + $0x3c] sm:$0xf]
    %v2277 = vunpack.c.l.b16 %v2245
    %v2278 = vunpack.c.l.b16 %v2246
    %v2279 = vunpack.c.l.b16 %v2247
    %v2280 = vunpack.c.l.b16 %v2248
    %v2281 = vunpack.c.l.b16 %v2249
    %v2282 = vunpack.c.l.b16 %v2250
    %v2283 = vunpack.c.l.b16 %v2251
    %v2284 = vunpack.c.l.b16 %v2252
    %v2285 = vunpack.c.l.b16 %v2253
    %v2286 = vunpack.c.l.b16 %v2254
    %v2287 = vunpack.c.l.b16 %v2255
    %v2288 = vunpack.c.l.b16 %v2256
    %v2289 = vunpack.c.l.b16 %v2257
    %v2290 = vunpack.c.l.b16 %v2258
    %v2291 = vunpack.c.l.b16 %v2259
    %v2292 = vunpack.c.l.b16 %v2260
    %v2293 = vpack.c.b16 %v2278, %v2277
    %v2294 = vpack.c.b16 %v2280, %v2279
    %v2295 = vpack.c.b16 %v2282, %v2281
    %v2296 = vpack.c.b16 %v2284, %v2283
    %v2297 = vpack.c.b16 %v2286, %v2285
    %v2298 = vpack.c.b16 %v2288, %v2287
    %v2299 = vpack.c.b16 %v2290, %v2289
    %v2300 = vpack.c.b16 %v2292, %v2291
    %2309 = vmatprep.subr.bf16.mxu0 0
    %2310 = vmatpush1.bf16.msra.mxu0 %v2300
    %2311 = vmatprep.subr.bf16.mxu0 0
    %2312 = vmatpush1.bf16.msra.mxu0 %v2299
    %2313 = vmatprep.subr.bf16.mxu0 0
    %2314 = vmatpush1.bf16.msra.mxu0 %v2298
    %2315 = vmatprep.subr.bf16.mxu0 0
    %2316 = vmatpush1.bf16.msra.mxu0 %v2297
    %2317 = vmatprep.subr.bf16.mxu0 0
    %2318 = vmatpush1.bf16.msra.mxu0 %v2296
    %2319 = vmatprep.subr.bf16.mxu0 0
    %2320 = vmatpush1.bf16.msra.mxu0 %v2295
    %2321 = vmatprep.subr.bf16.mxu0 0
    %2322 = vmatpush1.bf16.msra.mxu0 %v2294
    %2323 = vmatprep.subr.bf16.mxu0 0
    %2324 = vmatpush1.bf16.msra.mxu0 %v2293
    %2325 = vmatprep.subr.bf16.mxu0 0
    %2326 = vmatpush2.bf16.msra.mxu0 0
    %2327 = vmatprep.subr.bf16.mxu0 0
    %2328 = vmatpush2.bf16.msra.mxu0 0
    %2329 = vmatprep.subr.bf16.mxu0 0
    %2330 = vmatpush2.bf16.msra.mxu0 0
    %2331 = vmatprep.subr.bf16.mxu0 0
    %2332 = vmatpush2.bf16.msra.mxu0 0
    %2333 = vmatprep.subr.bf16.mxu0 0
    %2334 = vmatpush2.bf16.msra.mxu0 0
    %2335 = vmatprep.subr.bf16.mxu0 0
    %2336 = vmatpush2.bf16.msra.mxu0 0
    %2337 = vmatprep.subr.bf16.mxu0 0
    %2338 = vmatpush2.bf16.msra.mxu0 0
    %2339 = vmatprep.subr.bf16.mxu0 0
    %2340 = vmatpush2.bf16.msra.mxu0 0
    %2341 = vmatprep.mubr.bf16.mxu0 0
    %2342 = vmatmul.mubr.bf16.gmra.mxu0 %v2244
    %v2343 = vpop.f32.mrf.mxu0
    %v2344 = vadd.f32 0.0, %v2343
    %v2345 = vpop.f32.mrf.mxu0
    %v2346 = vpop.f32.mrf.mxu0
    %v2347 = vpop.f32.mrf.mxu0
    %2348 = vdwg.mxu0
    %2349 = vst [vmem:[#allocation10] sm:$0xff] %v2344
    // Predicated region
    $region42: #{tpu_custom_call.1} parent=1 // pred_check
      _
    $region43: #{tpu_custom_call.1} parent=1 // pred_check_branch
      %2351 = sbr.rel (0) target = $region45
    $region44: #{tpu_custom_call.1} parent=1 // pred_region
      %s2353 = ssub.s32 128, 128
      %2354 = vsyncadd [#allocation4], %s2353
      %s2356 = sshll.u32 [#allocation10], 4
      %s2357 = int_to_ptr.vmem [resolvable:$true] %s2356
      %2359 = dma.vmem_to_hbm [thread:$0]  %s2357, 128, %s6, [#allocation4]
    $region45: #{tpu_custom_call.1} parent=1 // pred_fallthru
      _
    // Predicated region
    $region46: #{tpu_custom_call.1} parent=1 // pred_check
      _
    $region47: #{tpu_custom_call.1} parent=1 // pred_check_branch
      %2361 = sbr.rel (0) target = $region49
    $region48: #{tpu_custom_call.1} parent=1 // pred_region
      %2362 = dma.done [#allocation4], 128
    $region49: #{tpu_custom_call.1} parent=1 // pred_fallthru
      _
    %2363 = vsyncpa [#allocation3], 1
    %2364 = vsyncpa [#allocation6], 1
    %2365 = vsyncpa [#allocation9], 1
    %2366 = vsyncpa [#allocation4], 1

</llo_original>
